<compile_context>
chip_gen: v7x
topology: tpu7x:2x2x1
jax: 0.10.0
libtpu: 0.0.40
codegen_flags: <defaults>
</compile_context>

<pallas_src>
import functools

import jax
import jax.numpy as jnp
from jax.experimental import pallas as pl
from jax.experimental.pallas import tpu as pltpu


# ----------------------------------------------------------------------------
# Pallas kernel: post-conv fusion
#   conv_ref : (expr, nr, S_tile)  bf16
#   d_ref    : (expr, S_tile)      bf16
#   g_ref    : (nr, 1)             f32
#   o_ref    : (1, S_tile)         f32
# ----------------------------------------------------------------------------
def _post_fuse_kernel(conv_ref, d_ref, g_ref, o_ref):
    expr = conv_ref.shape[0]
    # expr-step multiply-accumulate in f32 (upcast right after load: v5e has
    # no bf16 VPU; v6e/v7x still accumulate in f32 for accuracy).
    acc = (conv_ref[0].astype(jnp.float32) *
           d_ref[0:1, :].astype(jnp.float32))            # (nr, S_tile)
    for e_idx in range(1, expr):
        acc = acc + (conv_ref[e_idx].astype(jnp.float32) *
                     d_ref[e_idx:e_idx + 1, :].astype(jnp.float32))
    y = jnp.tanh(acc * g_ref[...])                       # (nr, S_tile)
    o_ref[...] = jnp.sum(y, axis=0, keepdims=True)       # (1, S_tile)


def _pick_s_tile(s, target=8192):
    """Largest multiple of 128 <= target that divides s (falls back to s).

    target=8192 keeps the double-buffered conv tile (~2 * expr*nr*tile*2B)
    well under the 32 MiB scoped VMEM default and the 64 MiB physical VMEM
    of a v7x TensorCore.
    """
    if s <= target:
        return s
    t = (min(target, s) // 128) * 128
    while t >= 128:
        if s % t == 0:
            return t
        t -= 128
    return s


def post_fuse_pallas(conv, d, gains_abs):
    """conv: (b,e,expr,nr,S) bf16, d: (b,e,expr,S) bf16, gains_abs: (nr,)
    -> (b, e, S) f32."""
    b, e, expr, nr, s = conv.shape
    be = b * e
    conv_f = conv.reshape(be, expr, nr, s)
    d_f = d.reshape(be, expr, s)
    g = gains_abs.reshape(nr, 1).astype(jnp.float32)

    s_tile = _pick_s_tile(s)
    grid = (be, s // s_tile)

    bytes_accessed = int(conv_f.size * conv_f.dtype.itemsize
                         + d_f.size * d_f.dtype.itemsize
                         + g.size * 4
                         + be * s * 4)
    cost = pl.CostEstimate(
        flops=int(be * s * nr * (2 * expr + 2)),
        transcendentals=int(be * s * nr),
        bytes_accessed=bytes_accessed,
    )

    out = pl.pallas_call(
        _post_fuse_kernel,
        grid=grid,
        in_specs=[
            # leading be dim squeezed; last two block dims are (nr, S_tile)
            # -> exact (16, 128k) lane/sublane packing for bf16.
            pl.BlockSpec((None, expr, nr, s_tile), lambda i, j: (i, 0, 0, j)),
            pl.BlockSpec((None, expr, s_tile), lambda i, j: (i, 0, j)),
            pl.BlockSpec((nr, 1), lambda i, j: (0, 0)),
        ],
        out_specs=pl.BlockSpec((None, 1, s_tile), lambda i, j: (i, 0, j)),
        out_shape=jax.ShapeDtypeStruct((be, 1, s), jnp.float32),
        compiler_params=pltpu.CompilerParams(
            dimension_semantics=("parallel", "parallel"),
            vmem_limit_bytes=32 * 1024 * 1024),
        cost_estimate=cost,
    )(conv_f, d_f, g)
    return out.reshape(b, e, s)


# ----------------------------------------------------------------------------
# JAX glue: helpers mirroring the external torch helpers
# ----------------------------------------------------------------------------
def unit_norm(x, axis=-1, eps=1e-8):
    n = jnp.sqrt(jnp.sum(x * x, axis=axis, keepdims=True))
    return x / (n + eps)


def _linear_resample_matrix(n_in, n_out):
    """Dense (n_in, n_out) matrix equivalent to F.interpolate(mode='linear',
    align_corners=False) on the last axis — avoids XLA gather on TPU."""
    i = jnp.arange(n_out, dtype=jnp.float32)
    src = jnp.clip((i + 0.5) * (n_in / n_out) - 0.5, 0.0, n_in - 1)
    lo = jnp.floor(src).astype(jnp.int32)
    hi = jnp.minimum(lo + 1, n_in - 1)
    w = src - lo.astype(jnp.float32)
    f = jnp.arange(n_in)[:, None]
    mat = ((f == lo[None, :]).astype(jnp.float32) * (1.0 - w)[None, :]
           + (f == hi[None, :]).astype(jnp.float32) * w[None, :])
    return mat


def interpolate_last_axis(x, size):
    n = x.shape[-1]
    if n == size:
        return x
    mat = _linear_resample_matrix(n, size)
    return jnp.einsum('...f,fs->...s', x, mat,
                      preferred_element_type=jnp.float32)


def fft_convolve(a, b, out_dtype=None):
    """Linear convolution (zero-pad to 2N, multiply spectra, keep first N)."""
    n = a.shape[-1]
    a_pad = jnp.concatenate([a, jnp.zeros_like(a)], axis=-1)
    b_pad = jnp.concatenate([b, jnp.zeros_like(b)], axis=-1)
    spec = jnp.fft.rfft(a_pad, axis=-1) * jnp.fft.rfft(b_pad, axis=-1)
    out = jnp.fft.irfft(spec, n=2 * n, axis=-1)[..., :n]
    if out_dtype is not None:
        out = out.astype(out_dtype)
    return out


def materialize_resonance(amp, phase, decay, window_size, base_resonance,
                          n_samples):
    """FFTResonanceBlock._materialize_fft_resonances equivalent.

    amp/phase/decay: (n_resonances, n_coeffs, expressivity)
    returns (1, 1, expressivity, n_resonances, n_samples)   <-- note layout:
    (expr, nr) ordering so the downstream conv tensor lands directly in the
    layout the Pallas post-fusion kernel consumes.
    """
    # TODO(synk): freq_domain_transfer_function_to_resonance is an external
    # library function; this reimplements its described semantics (geometric
    # per-bin magnitude decay, per-hop phase advance of pi*k for hop=window/2,
    # hann overlap-add).
    res_span = 1.0 - base_resonance
    res_factor = 0.9
    nr, n_coeffs, expr = amp.shape
    step = window_size // 2
    n_frames = n_samples // step

    amp_t = jnp.transpose(amp, (0, 2, 1))      # (nr, expr, C)
    phase_t = jnp.transpose(phase, (0, 2, 1))
    decay_t = jnp.transpose(decay, (0, 2, 1))

    coeffs = base_resonance + jax.nn.sigmoid(decay_t) * res_span * res_factor
    start_phase = jnp.tanh(phase_t) * jnp.pi
    start_mags = jnp.abs(amp_t)

    t = jnp.arange(n_frames, dtype=jnp.float32)                  # (F,)
    log_c = jnp.log(coeffs + 1e-12)                              # (nr,expr,C)
    decay_per_frame = jnp.exp(log_c[:, :, None, :] * t[None, None, :, None])
    mags = start_mags[:, :, None, :] * decay_per_frame           # (nr,expr,F,C)

    # per-hop phase advance for bin k with hop = window/2 is pi*k
    bin_advance = jnp.pi * jnp.arange(n_coeffs, dtype=jnp.float32)
    phases = (start_phase[:, :, None, :]
              + t[None, None, :, None] * bin_advance[None, None, None, :])

    spec = mags * jnp.exp(1j * phases)
    frames_td = jnp.fft.irfft(spec, n=window_size, axis=-1)      # (nr,expr,F,W)

    w = 0.5 * (1.0 - jnp.cos(2.0 * jnp.pi *
                             jnp.arange(window_size, dtype=jnp.float32)
                             / window_size))
    windowed = frames_td * w

    first = windowed[..., :step]                                  # (nr,expr,F,step)
    second = windowed[..., step:]
    second_shifted = jnp.concatenate(
        [jnp.zeros_like(second[..., :1, :]), second[..., :-1, :]], axis=-2)
    ola = first + second_shifted
    res = ola.reshape(nr, expr, n_frames * step)                  # (nr,expr,S)
    res = jnp.transpose(res, (1, 0, 2))                           # (expr,nr,S)
    return res.reshape(1, 1, expr, nr, n_samples)


# ----------------------------------------------------------------------------
# execute_layer / ResonanceLayer / ResonanceStack forward
# ----------------------------------------------------------------------------
def layer_forward(cs, deformations, layer_params, noise_key, window_size,
                  base_resonance, n_samples):
    b, e, cpd, frames = cs.shape
    router = layer_params["router"]                     # (cpd, nr)
    nr = router.shape[1]

    # Routing: tiny contraction (cpd=nr=16) -> plain einsum directly from the
    # (b,e,cpd,frames) layout. No pallas_call overhead, no wrapper transposes.
    routed = jnp.einsum('becf,cr->berf', cs, router,
                        preferred_element_type=jnp.float32)   # (b,e,nr,frames)
    before_upsample = routed

    # resonances in (1,1,expr,nr,S) layout
    res = materialize_resonance(layer_params["amp"], layer_params["phase"],
                                layer_params["decay"], window_size,
                                base_resonance, n_samples)
    res = unit_norm(res, axis=-1)

    # upsample control (resample matmul, no gather) and apply U(-1,1) noise
    r = routed.reshape(b, e, 1, nr, frames)
    r = interpolate_last_axis(r, n_samples)             # (b,e,1,nr,S)
    noise = jax.random.uniform(noise_key, r.shape, minval=-1.0, maxval=1.0)
    r = r * noise

    # FFT convolution (glue: no Pallas FFT primitive on TPU). Output lands
    # directly in (b,e,expr,nr,S) and is carried through HBM as bf16 (the
    # post-fusion kernel is HBM-bound; f32 accumulation happens in-kernel).
    conv = fft_convolve(r, res, out_dtype=jnp.bfloat16)  # (b,e,expr,nr,S)

    # deformation mixture
    base_def = jnp.zeros_like(deformations).at[:, :, 0:1, :].set(1.0)
    d = jax.nn.softmax(base_def + deformations, axis=-2)    # (b,e,expr,F)
    d = interpolate_last_axis(d, n_samples).astype(jnp.bfloat16)  # (b,e,expr,S)

    # fused reduction / tanh gain / resonance sum (Pallas)
    gains_abs = jnp.abs(layer_params["gains"][:, 0])         # (nr,)
    summed = post_fuse_pallas(conv, d, gains_abs)            # (b,e,S) f32
    return summed.reshape(b, e, 1, n_samples), before_upsample


def resonance_stack_forward(cp, deformations, params, noise_key, window_size,
                            base_resonance, n_samples):
    b, e, _, _ = cp.shape
    n_layers = len(params["layers"])
    keys = jax.random.split(noise_key, n_layers)
    outputs = []
    cs = cp
    for li, lp in enumerate(params["layers"]):
        out, cs = layer_forward(cs, deformations, lp, keys[li], window_size,
                                base_resonance, n_samples)
        outputs.append(out)
    final = jnp.stack(outputs, axis=-1)                    # (b,e,1,S,L)
    mx = jax.nn.softmax(params["mix"], axis=-1)            # (L,)
    final = jnp.sum(final * mx, axis=-1)                   # (b,e,1,S)
    return final.reshape(b, e, n_samples)


# ----------------------------------------------------------------------------
# deterministic parameter init (mirrors module __init__ shapes)
# ----------------------------------------------------------------------------
def init_params(key, n_layers, window_size, cpd, nr, expr):
    n_coeffs = window_size // 2 + 1
    layers = []
    for _ in range(n_layers):
        key, *ks = jax.random.split(key, 9)

        def init_res(k1, k2):
            res = jax.random.uniform(k1, (nr, n_coeffs, 1),
                                     minval=0.01, maxval=1.0)
            deform = jax.random.uniform(k2, (1, n_coeffs, expr),
                                        minval=-0.02, maxval=0.02)
            return res + deform

        layers.append(dict(
            router=jax.random.uniform(ks[0], (cpd, nr), minval=-1.0,
                                      maxval=1.0),
            gains=jax.random.uniform(ks[1], (nr, 1), minval=0.01, maxval=1.1),
            amp=init_res(ks[2], ks[3]),
            phase=init_res(ks[4], ks[5]),
            decay=init_res(ks[6], ks[7]),
        ))
    mix = jnp.zeros((n_layers,), jnp.float32)
    return dict(layers=layers, mix=mix)


# ----------------------------------------------------------------------------
if __name__ == "__main__":
    # small shapes consistent with the module; control_plane_dim must equal
    # n_resonances for the layer stacking to type-check (as in the torch code).
    B, E = 2, 2
    CPD = NR = 16
    EXPR = 4
    N_FRAMES = 8
    N_SAMPLES = 256
    WINDOW = 64
    N_LAYERS = 2
    BASE_RES = 0.5

    key = jax.random.PRNGKey(0)
    k_cp, k_def, k_par, k_noise = jax.random.split(key, 4)

    cp = jax.random.uniform(k_cp, (B, E, CPD, N_FRAMES),
                            minval=-0.01, maxval=0.01, dtype=jnp.float32)
    deformations = jax.random.uniform(k_def, (B, E, EXPR, N_FRAMES),
                                      minval=-0.01, maxval=0.01,
                                      dtype=jnp.float32)
    params = init_params(k_par, N_LAYERS, WINDOW, CPD, NR, EXPR)

    fwd = jax.jit(functools.partial(resonance_stack_forward,
                                    window_size=WINDOW,
                                    base_resonance=BASE_RES,
                                    n_samples=N_SAMPLES))
    out = fwd(cp, deformations, params, k_noise)
    out = jax.block_until_ready(out)

    assert out.shape == (B, E, N_SAMPLES), out.shape
    assert bool(jnp.all(jnp.isfinite(out)))
    print("KERNEL_OK")
</pallas_src>

<mosaic_0001>
module attributes {stable_mosaic.version = 11 : i64} {
  func.func @_post_fuse_kernel(%arg0: i32, %arg1: i32, %arg2: memref<1x4x16x256xbf16, #tpu.memory_space<vmem>>, %arg3: memref<1x4x256xbf16, #tpu.memory_space<vmem>>, %arg4: memref<16x1xf32, #tpu.memory_space<vmem>>, %arg5: memref<1x1x256xf32, #tpu.memory_space<vmem>>) attributes {dimension_semantics = [#tpu.dimension_semantics<parallel>, #tpu.dimension_semantics<parallel>], iteration_bounds = array<i64: 4, 1>, scalar_prefetch = 0 : i64, scratch_operands = 0 : i64, tpu.core_type = #tpu.core_type<tc>, window_params = [{transform_indices = @transform_0, window_bounds = array<i64: 1, 4, 16, 256>}, {transform_indices = @transform_1, window_bounds = array<i64: 1, 4, 256>}, {pipeline_mode = #tpu.pipeline_mode<synchronous>, transform_indices = @transform_2, window_bounds = array<i64: 16, 1>}, {transform_indices = @transform_3, window_bounds = array<i64: 1, 1, 256>}]} {
    %c0 = arith.constant 0 : index
    %c0_0 = arith.constant 0 : index
    %c0_1 = arith.constant 0 : index
    %c0_2 = arith.constant 0 : index
    %0 = vector.load %arg2[%c0, %c0_0, %c0_1, %c0_2] : memref<1x4x16x256xbf16, #tpu.memory_space<vmem>>, vector<1x1x16x256xbf16>
    %1 = vector.shape_cast %0 : vector<1x1x16x256xbf16> to vector<16x256xbf16>
    %2 = arith.extf %1 : vector<16x256xbf16> to vector<16x256xf32>
    %c0_3 = arith.constant 0 : index
    %c0_4 = arith.constant 0 : index
    %c0_5 = arith.constant 0 : index
    %3 = vector.load %arg3[%c0_3, %c0_4, %c0_5] : memref<1x4x256xbf16, #tpu.memory_space<vmem>>, vector<1x1x256xbf16>
    %4 = vector.shape_cast %3 : vector<1x1x256xbf16> to vector<1x256xbf16>
    %5 = arith.extf %4 : vector<1x256xbf16> to vector<1x256xf32>
    %6 = vector.broadcast %5 : vector<1x256xf32> to vector<16x256xf32>
    %7 = arith.mulf %2, %6 : vector<16x256xf32>
    %c0_6 = arith.constant 0 : index
    %c1 = arith.constant 1 : index
    %c0_7 = arith.constant 0 : index
    %c0_8 = arith.constant 0 : index
    %8 = vector.load %arg2[%c0_6, %c1, %c0_7, %c0_8] : memref<1x4x16x256xbf16, #tpu.memory_space<vmem>>, vector<1x1x16x256xbf16>
    %9 = vector.shape_cast %8 : vector<1x1x16x256xbf16> to vector<16x256xbf16>
    %10 = arith.extf %9 : vector<16x256xbf16> to vector<16x256xf32>
    %c0_9 = arith.constant 0 : index
    %c1_10 = arith.constant 1 : index
    %c0_11 = arith.constant 0 : index
    %11 = vector.load %arg3[%c0_9, %c1_10, %c0_11] : memref<1x4x256xbf16, #tpu.memory_space<vmem>>, vector<1x1x256xbf16>
    %12 = vector.shape_cast %11 : vector<1x1x256xbf16> to vector<1x256xbf16>
    %13 = arith.extf %12 : vector<1x256xbf16> to vector<1x256xf32>
    %14 = vector.broadcast %13 : vector<1x256xf32> to vector<16x256xf32>
    %15 = arith.mulf %10, %14 : vector<16x256xf32>
    %16 = arith.addf %7, %15 : vector<16x256xf32>
    %c0_12 = arith.constant 0 : index
    %c2 = arith.constant 2 : index
    %c0_13 = arith.constant 0 : index
    %c0_14 = arith.constant 0 : index
    %17 = vector.load %arg2[%c0_12, %c2, %c0_13, %c0_14] : memref<1x4x16x256xbf16, #tpu.memory_space<vmem>>, vector<1x1x16x256xbf16>
    %18 = vector.shape_cast %17 : vector<1x1x16x256xbf16> to vector<16x256xbf16>
    %19 = arith.extf %18 : vector<16x256xbf16> to vector<16x256xf32>
    %c0_15 = arith.constant 0 : index
    %c2_16 = arith.constant 2 : index
    %c0_17 = arith.constant 0 : index
    %20 = vector.load %arg3[%c0_15, %c2_16, %c0_17] : memref<1x4x256xbf16, #tpu.memory_space<vmem>>, vector<1x1x256xbf16>
    %21 = vector.shape_cast %20 : vector<1x1x256xbf16> to vector<1x256xbf16>
    %22 = arith.extf %21 : vector<1x256xbf16> to vector<1x256xf32>
    %23 = vector.broadcast %22 : vector<1x256xf32> to vector<16x256xf32>
    %24 = arith.mulf %19, %23 : vector<16x256xf32>
    %25 = arith.addf %16, %24 : vector<16x256xf32>
    %c0_18 = arith.constant 0 : index
    %c3 = arith.constant 3 : index
    %c0_19 = arith.constant 0 : index
    %c0_20 = arith.constant 0 : index
    %26 = vector.load %arg2[%c0_18, %c3, %c0_19, %c0_20] : memref<1x4x16x256xbf16, #tpu.memory_space<vmem>>, vector<1x1x16x256xbf16>
    %27 = vector.shape_cast %26 : vector<1x1x16x256xbf16> to vector<16x256xbf16>
    %28 = arith.extf %27 : vector<16x256xbf16> to vector<16x256xf32>
    %c0_21 = arith.constant 0 : index
    %c3_22 = arith.constant 3 : index
    %c0_23 = arith.constant 0 : index
    %29 = vector.load %arg3[%c0_21, %c3_22, %c0_23] : memref<1x4x256xbf16, #tpu.memory_space<vmem>>, vector<1x1x256xbf16>
    %30 = vector.shape_cast %29 : vector<1x1x256xbf16> to vector<1x256xbf16>
    %31 = arith.extf %30 : vector<1x256xbf16> to vector<1x256xf32>
    %32 = vector.broadcast %31 : vector<1x256xf32> to vector<16x256xf32>
    %33 = arith.mulf %28, %32 : vector<16x256xf32>
    %34 = arith.addf %25, %33 : vector<16x256xf32>
    %c0_24 = arith.constant 0 : index
    %c0_25 = arith.constant 0 : index
    %35 = vector.load %arg4[%c0_24, %c0_25] : memref<16x1xf32, #tpu.memory_space<vmem>>, vector<16x1xf32>
    %36 = vector.broadcast %35 : vector<16x1xf32> to vector<16x256xf32>
    %37 = arith.mulf %34, %36 : vector<16x256xf32>
    %38 = math.tanh %37 : vector<16x256xf32>
    %cst = arith.constant dense<0.000000e+00> : vector<256xf32>
    %39 = vector.multi_reduction <add>, %38, %cst [0] : vector<16x256xf32> to vector<256xf32>
    %40 = vector.shape_cast %39 : vector<256xf32> to vector<1x256xf32>
    %c0_26 = arith.constant 0 : index
    %c0_27 = arith.constant 0 : index
    %c0_28 = arith.constant 0 : index
    %41 = vector.load %arg5[%c0_26, %c0_27, %c0_28] : memref<1x1x256xf32, #tpu.memory_space<vmem>>, vector<1x1x256xf32>
    %42 = vector.shape_cast %41 : vector<1x1x256xf32> to vector<1x256xf32>
    %43 = vector.shape_cast %40 : vector<1x256xf32> to vector<1x1x256xf32>
    tpu.vector_store %arg5[%c0_26, %c0_27, %c0_28], %43 {strides = array<i32>} : memref<1x1x256xf32, #tpu.memory_space<vmem>>, vector<1x1x256xf32>,
    return
  }
  func.func @transform_0(%arg0: i32, %arg1: i32) -> (i32, i32, i32, i32) {
    %c0_i32 = arith.constant 0 : i32
    %c0_i32_0 = arith.constant 0 : i32
    %c0_i32_1 = arith.constant 0 : i32
    return %arg0, %c0_i32, %c0_i32_0, %arg1 : i32, i32, i32, i32
  }
  func.func @transform_1(%arg0: i32, %arg1: i32) -> (i32, i32, i32) {
    %c0_i32 = arith.constant 0 : i32
    %c0_i32_0 = arith.constant 0 : i32
    return %arg0, %c0_i32, %arg1 : i32, i32, i32
  }
  func.func @transform_2(%arg0: i32, %arg1: i32) -> (i32, i32) {
    %c0_i32 = arith.constant 0 : i32
    %c0_i32_0 = arith.constant 0 : i32
    %c0_i32_1 = arith.constant 0 : i32
    return %c0_i32, %c0_i32_0 : i32, i32
  }
  func.func @transform_3(%arg0: i32, %arg1: i32) -> (i32, i32, i32) {
    %c0_i32 = arith.constant 0 : i32
    %c0_i32_0 = arith.constant 0 : i32
    return %arg0, %c0_i32, %arg1 : i32, i32, i32
  }
}

</mosaic_0001>

<llo_original>
// kernel: reverse.13
$region0: #{reverse.13}
  %s0 = inlined_call_operand.vmem [shape: f32[16,4,8,31], index: 0, kind: input, shape index: {}]
  %s1 = inlined_call_operand.vmem [shape: f32[16,4,8,31], index: 1, kind: output, shape index: {}]
  %v2 = vlaneseq
  %v3 = vsub.s32 30, %v2
  %4 = vset.pattern.permute.xlu0 %v3
  $region1: #{reverse.13} parent=0
    #allocation0 [shape = 'u8[262144]{0}', space=vmem, size = 0x40000, scoped, tag = 'operand span for operand 0']
    #allocation1 [shape = 'u8[262144]{0}', space=vmem, size = 0x40000, scoped, tag = 'operand span for operand 1']
    // Predicated region
    $region2: #{reverse.13} parent=1 // pred_check
      _
    $region3: #{reverse.13} parent=1 // pred_check_branch
      %6 = sbr.rel (0) target = $region5
    $region4: #{reverse.13} parent=1 // pred_region
      // Predicated region
      $region6: #{reverse.13} parent=4 // pred_check
        _
      $region7: #{reverse.13} parent=4 // pred_check_branch
        %8 = sbr.rel (0) target = $region9
      $region8: #{reverse.13} parent=4 // pred_region
        // Predicated region
        $region21: #{reverse.13} parent=8 // pred_check
          _
        $region22: #{reverse.13} parent=8 // pred_check_branch
          %149 = sbr.rel (0) target = $region24
        $region23: #{reverse.13} parent=8 // pred_region
          loop: start=0, step=1, limit=1
          $region25: #{reverse.13} parent=23 // loop_pre_header
            _
          $region26: #{reverse.13} parent=23 // loop_header
            %s151 = sphi 0, %s155
            %p152 = scmp.ge.s32.totalorder %s151, 1
            %s156 = sphi %s0, %s0
            %s157 = sphi [#allocation0], [#allocation0]
          $region27: #{reverse.13} parent=23 // loop_header_branch
            %154 = sbr.rel (%p152) target = $region31
          $region28: #{reverse.13} parent=23 // loop_body
            %v158 = vld [vmem:[%s156] sm:$0xff]
            %159 = vst [vmem:[%s157] sm:$0xff] %v158
            %v160 = vld [vmem:[%s156 + $0x8] sm:$0xff]
            %161 = vst [vmem:[%s157 + $0x8] sm:$0xff] %v160
            %v162 = vld [vmem:[%s156 + $0x10] sm:$0xff]
            %163 = vst [vmem:[%s157 + $0x10] sm:$0xff] %v162
            %v164 = vld [vmem:[%s156 + $0x18] sm:$0xff]
            %165 = vst [vmem:[%s157 + $0x18] sm:$0xff] %v164
            %v166 = vld [vmem:[%s156 + $0x20] sm:$0xff]
            %167 = vst [vmem:[%s157 + $0x20] sm:$0xff] %v166
            %v168 = vld [vmem:[%s156 + $0x28] sm:$0xff]
            %169 = vst [vmem:[%s157 + $0x28] sm:$0xff] %v168
            %v170 = vld [vmem:[%s156 + $0x30] sm:$0xff]
            %171 = vst [vmem:[%s157 + $0x30] sm:$0xff] %v170
            %v172 = vld [vmem:[%s156 + $0x38] sm:$0xff]
            %173 = vst [vmem:[%s157 + $0x38] sm:$0xff] %v172
            %v174 = vld [vmem:[%s156 + $0x40] sm:$0xff]
            %175 = vst [vmem:[%s157 + $0x40] sm:$0xff] %v174
            %v176 = vld [vmem:[%s156 + $0x48] sm:$0xff]
            %177 = vst [vmem:[%s157 + $0x48] sm:$0xff] %v176
            %v178 = vld [vmem:[%s156 + $0x50] sm:$0xff]
            %179 = vst [vmem:[%s157 + $0x50] sm:$0xff] %v178
            %v180 = vld [vmem:[%s156 + $0x58] sm:$0xff]
            %181 = vst [vmem:[%s157 + $0x58] sm:$0xff] %v180
            %v182 = vld [vmem:[%s156 + $0x60] sm:$0xff]
            %183 = vst [vmem:[%s157 + $0x60] sm:$0xff] %v182
            %v184 = vld [vmem:[%s156 + $0x68] sm:$0xff]
            %185 = vst [vmem:[%s157 + $0x68] sm:$0xff] %v184
            %v186 = vld [vmem:[%s156 + $0x70] sm:$0xff]
            %187 = vst [vmem:[%s157 + $0x70] sm:$0xff] %v186
            %v188 = vld [vmem:[%s156 + $0x78] sm:$0xff]
            %189 = vst [vmem:[%s157 + $0x78] sm:$0xff] %v188
            %v190 = vld [vmem:[%s156 + $0x80] sm:$0xff]
            %191 = vst [vmem:[%s157 + $0x80] sm:$0xff] %v190
            %v192 = vld [vmem:[%s156 + $0x88] sm:$0xff]
            %193 = vst [vmem:[%s157 + $0x88] sm:$0xff] %v192
            %v194 = vld [vmem:[%s156 + $0x90] sm:$0xff]
            %195 = vst [vmem:[%s157 + $0x90] sm:$0xff] %v194
            %v196 = vld [vmem:[%s156 + $0x98] sm:$0xff]
            %197 = vst [vmem:[%s157 + $0x98] sm:$0xff] %v196
            %v198 = vld [vmem:[%s156 + $0xa0] sm:$0xff]
            %199 = vst [vmem:[%s157 + $0xa0] sm:$0xff] %v198
            %v200 = vld [vmem:[%s156 + $0xa8] sm:$0xff]
            %201 = vst [vmem:[%s157 + $0xa8] sm:$0xff] %v200
            %v202 = vld [vmem:[%s156 + $0xb0] sm:$0xff]
            %203 = vst [vmem:[%s157 + $0xb0] sm:$0xff] %v202
            %v204 = vld [vmem:[%s156 + $0xb8] sm:$0xff]
            %205 = vst [vmem:[%s157 + $0xb8] sm:$0xff] %v204
            %v206 = vld [vmem:[%s156 + $0xc0] sm:$0xff]
            %207 = vst [vmem:[%s157 + $0xc0] sm:$0xff] %v206
            %v208 = vld [vmem:[%s156 + $0xc8] sm:$0xff]
            %209 = vst [vmem:[%s157 + $0xc8] sm:$0xff] %v208
            %v210 = vld [vmem:[%s156 + $0xd0] sm:$0xff]
            %211 = vst [vmem:[%s157 + $0xd0] sm:$0xff] %v210
            %v212 = vld [vmem:[%s156 + $0xd8] sm:$0xff]
            %213 = vst [vmem:[%s157 + $0xd8] sm:$0xff] %v212
            %v214 = vld [vmem:[%s156 + $0xe0] sm:$0xff]
            %215 = vst [vmem:[%s157 + $0xe0] sm:$0xff] %v214
            %v216 = vld [vmem:[%s156 + $0xe8] sm:$0xff]
            %217 = vst [vmem:[%s157 + $0xe8] sm:$0xff] %v216
            %v218 = vld [vmem:[%s156 + $0xf0] sm:$0xff]
            %219 = vst [vmem:[%s157 + $0xf0] sm:$0xff] %v218
            %v220 = vld [vmem:[%s156 + $0xf8] sm:$0xff]
            %221 = vst [vmem:[%s157 + $0xf8] sm:$0xff] %v220
            %v222 = vld [vmem:[%s156 + $0x100] sm:$0xff]
            %223 = vst [vmem:[%s157 + $0x100] sm:$0xff] %v222
            %v224 = vld [vmem:[%s156 + $0x108] sm:$0xff]
            %225 = vst [vmem:[%s157 + $0x108] sm:$0xff] %v224
            %v226 = vld [vmem:[%s156 + $0x110] sm:$0xff]
            %227 = vst [vmem:[%s157 + $0x110] sm:$0xff] %v226
            %v228 = vld [vmem:[%s156 + $0x118] sm:$0xff]
            %229 = vst [vmem:[%s157 + $0x118] sm:$0xff] %v228
            %v230 = vld [vmem:[%s156 + $0x120] sm:$0xff]
            %231 = vst [vmem:[%s157 + $0x120] sm:$0xff] %v230
            %v232 = vld [vmem:[%s156 + $0x128] sm:$0xff]
            %233 = vst [vmem:[%s157 + $0x128] sm:$0xff] %v232
            %v234 = vld [vmem:[%s156 + $0x130] sm:$0xff]
            %235 = vst [vmem:[%s157 + $0x130] sm:$0xff] %v234
            %v236 = vld [vmem:[%s156 + $0x138] sm:$0xff]
            %237 = vst [vmem:[%s157 + $0x138] sm:$0xff] %v236
            %v238 = vld [vmem:[%s156 + $0x140] sm:$0xff]
            %239 = vst [vmem:[%s157 + $0x140] sm:$0xff] %v238
            %v240 = vld [vmem:[%s156 + $0x148] sm:$0xff]
            %241 = vst [vmem:[%s157 + $0x148] sm:$0xff] %v240
            %v242 = vld [vmem:[%s156 + $0x150] sm:$0xff]
            %243 = vst [vmem:[%s157 + $0x150] sm:$0xff] %v242
            %v244 = vld [vmem:[%s156 + $0x158] sm:$0xff]
            %245 = vst [vmem:[%s157 + $0x158] sm:$0xff] %v244
            %v246 = vld [vmem:[%s156 + $0x160] sm:$0xff]
            %247 = vst [vmem:[%s157 + $0x160] sm:$0xff] %v246
            %v248 = vld [vmem:[%s156 + $0x168] sm:$0xff]
            %249 = vst [vmem:[%s157 + $0x168] sm:$0xff] %v248
            %v250 = vld [vmem:[%s156 + $0x170] sm:$0xff]
            %251 = vst [vmem:[%s157 + $0x170] sm:$0xff] %v250
            %v252 = vld [vmem:[%s156 + $0x178] sm:$0xff]
            %253 = vst [vmem:[%s157 + $0x178] sm:$0xff] %v252
            %v254 = vld [vmem:[%s156 + $0x180] sm:$0xff]
            %255 = vst [vmem:[%s157 + $0x180] sm:$0xff] %v254
            %v256 = vld [vmem:[%s156 + $0x188] sm:$0xff]
            %257 = vst [vmem:[%s157 + $0x188] sm:$0xff] %v256
            %v258 = vld [vmem:[%s156 + $0x190] sm:$0xff]
            %259 = vst [vmem:[%s157 + $0x190] sm:$0xff] %v258
            %v260 = vld [vmem:[%s156 + $0x198] sm:$0xff]
            %261 = vst [vmem:[%s157 + $0x198] sm:$0xff] %v260
            %v262 = vld [vmem:[%s156 + $0x1a0] sm:$0xff]
            %263 = vst [vmem:[%s157 + $0x1a0] sm:$0xff] %v262
            %v264 = vld [vmem:[%s156 + $0x1a8] sm:$0xff]
            %265 = vst [vmem:[%s157 + $0x1a8] sm:$0xff] %v264
            %v266 = vld [vmem:[%s156 + $0x1b0] sm:$0xff]
            %267 = vst [vmem:[%s157 + $0x1b0] sm:$0xff] %v266
            %v268 = vld [vmem:[%s156 + $0x1b8] sm:$0xff]
            %269 = vst [vmem:[%s157 + $0x1b8] sm:$0xff] %v268
            %v270 = vld [vmem:[%s156 + $0x1c0] sm:$0xff]
            %271 = vst [vmem:[%s157 + $0x1c0] sm:$0xff] %v270
            %v272 = vld [vmem:[%s156 + $0x1c8] sm:$0xff]
            %273 = vst [vmem:[%s157 + $0x1c8] sm:$0xff] %v272
            %v274 = vld [vmem:[%s156 + $0x1d0] sm:$0xff]
            %275 = vst [vmem:[%s157 + $0x1d0] sm:$0xff] %v274
            %v276 = vld [vmem:[%s156 + $0x1d8] sm:$0xff]
            %277 = vst [vmem:[%s157 + $0x1d8] sm:$0xff] %v276
            %v278 = vld [vmem:[%s156 + $0x1e0] sm:$0xff]
            %279 = vst [vmem:[%s157 + $0x1e0] sm:$0xff] %v278
            %v280 = vld [vmem:[%s156 + $0x1e8] sm:$0xff]
            %281 = vst [vmem:[%s157 + $0x1e8] sm:$0xff] %v280
            %v282 = vld [vmem:[%s156 + $0x1f0] sm:$0xff]
            %283 = vst [vmem:[%s157 + $0x1f0] sm:$0xff] %v282
            %v284 = vld [vmem:[%s156 + $0x1f8] sm:$0xff]
            %285 = vst [vmem:[%s157 + $0x1f8] sm:$0xff] %v284
          $region29: #{reverse.13} parent=23 // loop_footer
            %s155 = sadd.s32 1, %s151
          $region30: #{reverse.13} parent=23 // loop_footer_branch
            %150 = sbr.rel target = $region26
          $region31: #{reverse.13} parent=23 // loop_exit
            _
        $region24: #{reverse.13} parent=8 // pred_fallthru
          _
        // Predicated region
        $region32: #{reverse.13} parent=8 // pred_check
          _
        $region33: #{reverse.13} parent=8 // pred_check_branch
          %287 = sbr.rel target = $region35
        $region34: #{reverse.13} parent=8 // pred_region
          _
        $region35: #{reverse.13} parent=8 // pred_fallthru
          _
      $region9: #{reverse.13} parent=4 // pred_fallthru
        _
      // Predicated region
      $region10: #{reverse.13} parent=4 // pred_check
        _
      $region11: #{reverse.13} parent=4 // pred_check_branch
        %10 = sbr.rel target = $region13
      $region12: #{reverse.13} parent=4 // pred_region
        loop: start=0, step=1, limit=1
        $region14: #{reverse.13} parent=12 // loop_pre_header
          _
        $region15: #{reverse.13} parent=12 // loop_header
          %s13 = sphi 0, %s17
          %p14 = scmp.ge.s32.totalorder %s13, 1
          %s18 = sphi %s0, %s0
          %s19 = sphi [#allocation0], [#allocation0]
        $region16: #{reverse.13} parent=12 // loop_header_branch
          %16 = sbr.rel (%p14) target = $region20
        $region17: #{reverse.13} parent=12 // loop_body
          %v20 = vld [vmem:[%s18] sm:$0xff]
          %21 = vst [vmem:[%s19] sm:$0xff] %v20
          %v22 = vld [vmem:[%s18 + $0x8] sm:$0xff]
          %23 = vst [vmem:[%s19 + $0x8] sm:$0xff] %v22
          %v24 = vld [vmem:[%s18 + $0x10] sm:$0xff]
          %25 = vst [vmem:[%s19 + $0x10] sm:$0xff] %v24
          %v26 = vld [vmem:[%s18 + $0x18] sm:$0xff]
          %27 = vst [vmem:[%s19 + $0x18] sm:$0xff] %v26
          %v28 = vld [vmem:[%s18 + $0x20] sm:$0xff]
          %29 = vst [vmem:[%s19 + $0x20] sm:$0xff] %v28
          %v30 = vld [vmem:[%s18 + $0x28] sm:$0xff]
          %31 = vst [vmem:[%s19 + $0x28] sm:$0xff] %v30
          %v32 = vld [vmem:[%s18 + $0x30] sm:$0xff]
          %33 = vst [vmem:[%s19 + $0x30] sm:$0xff] %v32
          %v34 = vld [vmem:[%s18 + $0x38] sm:$0xff]
          %35 = vst [vmem:[%s19 + $0x38] sm:$0xff] %v34
          %v36 = vld [vmem:[%s18 + $0x40] sm:$0xff]
          %37 = vst [vmem:[%s19 + $0x40] sm:$0xff] %v36
          %v38 = vld [vmem:[%s18 + $0x48] sm:$0xff]
          %39 = vst [vmem:[%s19 + $0x48] sm:$0xff] %v38
          %v40 = vld [vmem:[%s18 + $0x50] sm:$0xff]
          %41 = vst [vmem:[%s19 + $0x50] sm:$0xff] %v40
          %v42 = vld [vmem:[%s18 + $0x58] sm:$0xff]
          %43 = vst [vmem:[%s19 + $0x58] sm:$0xff] %v42
          %v44 = vld [vmem:[%s18 + $0x60] sm:$0xff]
          %45 = vst [vmem:[%s19 + $0x60] sm:$0xff] %v44
          %v46 = vld [vmem:[%s18 + $0x68] sm:$0xff]
          %47 = vst [vmem:[%s19 + $0x68] sm:$0xff] %v46
          %v48 = vld [vmem:[%s18 + $0x70] sm:$0xff]
          %49 = vst [vmem:[%s19 + $0x70] sm:$0xff] %v48
          %v50 = vld [vmem:[%s18 + $0x78] sm:$0xff]
          %51 = vst [vmem:[%s19 + $0x78] sm:$0xff] %v50
          %v52 = vld [vmem:[%s18 + $0x80] sm:$0xff]
          %53 = vst [vmem:[%s19 + $0x80] sm:$0xff] %v52
          %v54 = vld [vmem:[%s18 + $0x88] sm:$0xff]
          %55 = vst [vmem:[%s19 + $0x88] sm:$0xff] %v54
          %v56 = vld [vmem:[%s18 + $0x90] sm:$0xff]
          %57 = vst [vmem:[%s19 + $0x90] sm:$0xff] %v56
          %v58 = vld [vmem:[%s18 + $0x98] sm:$0xff]
          %59 = vst [vmem:[%s19 + $0x98] sm:$0xff] %v58
          %v60 = vld [vmem:[%s18 + $0xa0] sm:$0xff]
          %61 = vst [vmem:[%s19 + $0xa0] sm:$0xff] %v60
          %v62 = vld [vmem:[%s18 + $0xa8] sm:$0xff]
          %63 = vst [vmem:[%s19 + $0xa8] sm:$0xff] %v62
          %v64 = vld [vmem:[%s18 + $0xb0] sm:$0xff]
          %65 = vst [vmem:[%s19 + $0xb0] sm:$0xff] %v64
          %v66 = vld [vmem:[%s18 + $0xb8] sm:$0xff]
          %67 = vst [vmem:[%s19 + $0xb8] sm:$0xff] %v66
          %v68 = vld [vmem:[%s18 + $0xc0] sm:$0xff]
          %69 = vst [vmem:[%s19 + $0xc0] sm:$0xff] %v68
          %v70 = vld [vmem:[%s18 + $0xc8] sm:$0xff]
          %71 = vst [vmem:[%s19 + $0xc8] sm:$0xff] %v70
          %v72 = vld [vmem:[%s18 + $0xd0] sm:$0xff]
          %73 = vst [vmem:[%s19 + $0xd0] sm:$0xff] %v72
          %v74 = vld [vmem:[%s18 + $0xd8] sm:$0xff]
          %75 = vst [vmem:[%s19 + $0xd8] sm:$0xff] %v74
          %v76 = vld [vmem:[%s18 + $0xe0] sm:$0xff]
          %77 = vst [vmem:[%s19 + $0xe0] sm:$0xff] %v76
          %v78 = vld [vmem:[%s18 + $0xe8] sm:$0xff]
          %79 = vst [vmem:[%s19 + $0xe8] sm:$0xff] %v78
          %v80 = vld [vmem:[%s18 + $0xf0] sm:$0xff]
          %81 = vst [vmem:[%s19 + $0xf0] sm:$0xff] %v80
          %v82 = vld [vmem:[%s18 + $0xf8] sm:$0xff]
          %83 = vst [vmem:[%s19 + $0xf8] sm:$0xff] %v82
          %v84 = vld [vmem:[%s18 + $0x100] sm:$0xff]
          %85 = vst [vmem:[%s19 + $0x100] sm:$0xff] %v84
          %v86 = vld [vmem:[%s18 + $0x108] sm:$0xff]
          %87 = vst [vmem:[%s19 + $0x108] sm:$0xff] %v86
          %v88 = vld [vmem:[%s18 + $0x110] sm:$0xff]
          %89 = vst [vmem:[%s19 + $0x110] sm:$0xff] %v88
          %v90 = vld [vmem:[%s18 + $0x118] sm:$0xff]
          %91 = vst [vmem:[%s19 + $0x118] sm:$0xff] %v90
          %v92 = vld [vmem:[%s18 + $0x120] sm:$0xff]
          %93 = vst [vmem:[%s19 + $0x120] sm:$0xff] %v92
          %v94 = vld [vmem:[%s18 + $0x128] sm:$0xff]
          %95 = vst [vmem:[%s19 + $0x128] sm:$0xff] %v94
          %v96 = vld [vmem:[%s18 + $0x130] sm:$0xff]
          %97 = vst [vmem:[%s19 + $0x130] sm:$0xff] %v96
          %v98 = vld [vmem:[%s18 + $0x138] sm:$0xff]
          %99 = vst [vmem:[%s19 + $0x138] sm:$0xff] %v98
          %v100 = vld [vmem:[%s18 + $0x140] sm:$0xff]
          %101 = vst [vmem:[%s19 + $0x140] sm:$0xff] %v100
          %v102 = vld [vmem:[%s18 + $0x148] sm:$0xff]
          %103 = vst [vmem:[%s19 + $0x148] sm:$0xff] %v102
          %v104 = vld [vmem:[%s18 + $0x150] sm:$0xff]
          %105 = vst [vmem:[%s19 + $0x150] sm:$0xff] %v104
          %v106 = vld [vmem:[%s18 + $0x158] sm:$0xff]
          %107 = vst [vmem:[%s19 + $0x158] sm:$0xff] %v106
          %v108 = vld [vmem:[%s18 + $0x160] sm:$0xff]
          %109 = vst [vmem:[%s19 + $0x160] sm:$0xff] %v108
          %v110 = vld [vmem:[%s18 + $0x168] sm:$0xff]
          %111 = vst [vmem:[%s19 + $0x168] sm:$0xff] %v110
          %v112 = vld [vmem:[%s18 + $0x170] sm:$0xff]
          %113 = vst [vmem:[%s19 + $0x170] sm:$0xff] %v112
          %v114 = vld [vmem:[%s18 + $0x178] sm:$0xff]
          %115 = vst [vmem:[%s19 + $0x178] sm:$0xff] %v114
          %v116 = vld [vmem:[%s18 + $0x180] sm:$0xff]
          %117 = vst [vmem:[%s19 + $0x180] sm:$0xff] %v116
          %v118 = vld [vmem:[%s18 + $0x188] sm:$0xff]
          %119 = vst [vmem:[%s19 + $0x188] sm:$0xff] %v118
          %v120 = vld [vmem:[%s18 + $0x190] sm:$0xff]
          %121 = vst [vmem:[%s19 + $0x190] sm:$0xff] %v120
          %v122 = vld [vmem:[%s18 + $0x198] sm:$0xff]
          %123 = vst [vmem:[%s19 + $0x198] sm:$0xff] %v122
          %v124 = vld [vmem:[%s18 + $0x1a0] sm:$0xff]
          %125 = vst [vmem:[%s19 + $0x1a0] sm:$0xff] %v124
          %v126 = vld [vmem:[%s18 + $0x1a8] sm:$0xff]
          %127 = vst [vmem:[%s19 + $0x1a8] sm:$0xff] %v126
          %v128 = vld [vmem:[%s18 + $0x1b0] sm:$0xff]
          %129 = vst [vmem:[%s19 + $0x1b0] sm:$0xff] %v128
          %v130 = vld [vmem:[%s18 + $0x1b8] sm:$0xff]
          %131 = vst [vmem:[%s19 + $0x1b8] sm:$0xff] %v130
          %v132 = vld [vmem:[%s18 + $0x1c0] sm:$0xff]
          %133 = vst [vmem:[%s19 + $0x1c0] sm:$0xff] %v132
          %v134 = vld [vmem:[%s18 + $0x1c8] sm:$0xff]
          %135 = vst [vmem:[%s19 + $0x1c8] sm:$0xff] %v134
          %v136 = vld [vmem:[%s18 + $0x1d0] sm:$0xff]
          %137 = vst [vmem:[%s19 + $0x1d0] sm:$0xff] %v136
          %v138 = vld [vmem:[%s18 + $0x1d8] sm:$0xff]
          %139 = vst [vmem:[%s19 + $0x1d8] sm:$0xff] %v138
          %v140 = vld [vmem:[%s18 + $0x1e0] sm:$0xff]
          %141 = vst [vmem:[%s19 + $0x1e0] sm:$0xff] %v140
          %v142 = vld [vmem:[%s18 + $0x1e8] sm:$0xff]
          %143 = vst [vmem:[%s19 + $0x1e8] sm:$0xff] %v142
          %v144 = vld [vmem:[%s18 + $0x1f0] sm:$0xff]
          %145 = vst [vmem:[%s19 + $0x1f0] sm:$0xff] %v144
          %v146 = vld [vmem:[%s18 + $0x1f8] sm:$0xff]
          %147 = vst [vmem:[%s19 + $0x1f8] sm:$0xff] %v146
        $region18: #{reverse.13} parent=12 // loop_footer
          %s17 = sadd.s32 1, %s13
        $region19: #{reverse.13} parent=12 // loop_footer_branch
          %12 = sbr.rel target = $region15
        $region20: #{reverse.13} parent=12 // loop_exit
          _
      $region13: #{reverse.13} parent=4 // pred_fallthru
        _
    $region5: #{reverse.13} parent=1 // pred_fallthru
      _
    %288 = vnop
    %v289 = vld [vmem:[#allocation0] sm:$0xff]
    %290 = vperm.xlu0 %4, %v289
    %v291 = vpop.permute.xlu0 %290
    %292 = vst [vmem:[#allocation1] sm:$0xff] %v291
    %s293 = scalar_lea.vmem [#allocation1], 8
    %s294 = scalar_lea.vmem [#allocation0], 8
    %v295 = vld [vmem:[%s294] sm:$0xff]
    %296 = vperm.xlu0 %4, %v295
    %v297 = vpop.permute.xlu0 %296
    %298 = vst [vmem:[%s293] sm:$0xff] %v297
    %s299 = scalar_lea.vmem [#allocation1], 16
    %s300 = scalar_lea.vmem [#allocation0], 16
    %v301 = vld [vmem:[%s300] sm:$0xff]
    %302 = vperm.xlu0 %4, %v301
    %v303 = vpop.permute.xlu0 %302
    %304 = vst [vmem:[%s299] sm:$0xff] %v303
    %s305 = scalar_lea.vmem %s299, 8 [#allocation1]
    %s306 = scalar_lea.vmem %s300, 8 [#allocation0]
    %v307 = vld [vmem:[%s306] sm:$0xff]
    %308 = vperm.xlu0 %4, %v307
    %v309 = vpop.permute.xlu0 %308
    %310 = vst [vmem:[%s305] sm:$0xff] %v309
    %s311 = scalar_lea.vmem [#allocation1], 32
    %s312 = scalar_lea.vmem [#allocation0], 32
    %v313 = vld [vmem:[%s312] sm:$0xff]
    %314 = vperm.xlu0 %4, %v313
    %v315 = vpop.permute.xlu0 %314
    %316 = vst [vmem:[%s311] sm:$0xff] %v315
    %s317 = scalar_lea.vmem %s311, 8 [#allocation1]
    %s318 = scalar_lea.vmem %s312, 8 [#allocation0]
    %v319 = vld [vmem:[%s318] sm:$0xff]
    %320 = vperm.xlu0 %4, %v319
    %v321 = vpop.permute.xlu0 %320
    %322 = vst [vmem:[%s317] sm:$0xff] %v321
    %s323 = scalar_lea.vmem [#allocation1], 48
    %s324 = scalar_lea.vmem [#allocation0], 48
    %v325 = vld [vmem:[%s324] sm:$0xff]
    %326 = vperm.xlu0 %4, %v325
    %v327 = vpop.permute.xlu0 %326
    %328 = vst [vmem:[%s323] sm:$0xff] %v327
    %s329 = scalar_lea.vmem %s323, 8 [#allocation1]
    %s330 = scalar_lea.vmem %s324, 8 [#allocation0]
    %v331 = vld [vmem:[%s330] sm:$0xff]
    %332 = vperm.xlu0 %4, %v331
    %v333 = vpop.permute.xlu0 %332
    %334 = vst [vmem:[%s329] sm:$0xff] %v333
    %s335 = scalar_lea.vmem [#allocation1], 64
    %s336 = scalar_lea.vmem [#allocation0], 64
    %v337 = vld [vmem:[%s336] sm:$0xff]
    %338 = vperm.xlu0 %4, %v337
    %v339 = vpop.permute.xlu0 %338
    %340 = vst [vmem:[%s335] sm:$0xff] %v339
    %s341 = scalar_lea.vmem %s335, 8 [#allocation1]
    %s342 = scalar_lea.vmem %s336, 8 [#allocation0]
    %v343 = vld [vmem:[%s342] sm:$0xff]
    %344 = vperm.xlu0 %4, %v343
    %v345 = vpop.permute.xlu0 %344
    %346 = vst [vmem:[%s341] sm:$0xff] %v345
    %s347 = scalar_lea.vmem [#allocation1], 80
    %s348 = scalar_lea.vmem [#allocation0], 80
    %v349 = vld [vmem:[%s348] sm:$0xff]
    %350 = vperm.xlu0 %4, %v349
    %v351 = vpop.permute.xlu0 %350
    %352 = vst [vmem:[%s347] sm:$0xff] %v351
    %s353 = scalar_lea.vmem %s347, 8 [#allocation1]
    %s354 = scalar_lea.vmem %s348, 8 [#allocation0]
    %v355 = vld [vmem:[%s354] sm:$0xff]
    %356 = vperm.xlu0 %4, %v355
    %v357 = vpop.permute.xlu0 %356
    %358 = vst [vmem:[%s353] sm:$0xff] %v357
    %s359 = scalar_lea.vmem [#allocation1], 96
    %s360 = scalar_lea.vmem [#allocation0], 96
    %v361 = vld [vmem:[%s360] sm:$0xff]
    %362 = vperm.xlu0 %4, %v361
    %v363 = vpop.permute.xlu0 %362
    %364 = vst [vmem:[%s359] sm:$0xff] %v363
    %s365 = scalar_lea.vmem %s359, 8 [#allocation1]
    %s366 = scalar_lea.vmem %s360, 8 [#allocation0]
    %v367 = vld [vmem:[%s366] sm:$0xff]
    %368 = vperm.xlu0 %4, %v367
    %v369 = vpop.permute.xlu0 %368
    %370 = vst [vmem:[%s365] sm:$0xff] %v369
    %s371 = scalar_lea.vmem [#allocation1], 112
    %s372 = scalar_lea.vmem [#allocation0], 112
    %v373 = vld [vmem:[%s372] sm:$0xff]
    %374 = vperm.xlu0 %4, %v373
    %v375 = vpop.permute.xlu0 %374
    %376 = vst [vmem:[%s371] sm:$0xff] %v375
    %s377 = scalar_lea.vmem %s371, 8 [#allocation1]
    %s378 = scalar_lea.vmem %s372, 8 [#allocation0]
    %v379 = vld [vmem:[%s378] sm:$0xff]
    %380 = vperm.xlu0 %4, %v379
    %v381 = vpop.permute.xlu0 %380
    %382 = vst [vmem:[%s377] sm:$0xff] %v381
    %s383 = scalar_lea.vmem [#allocation1], 128
    %s384 = scalar_lea.vmem [#allocation0], 128
    %v385 = vld [vmem:[%s384] sm:$0xff]
    %386 = vperm.xlu0 %4, %v385
    %v387 = vpop.permute.xlu0 %386
    %388 = vst [vmem:[%s383] sm:$0xff] %v387
    %s389 = scalar_lea.vmem %s383, 8 [#allocation1]
    %s390 = scalar_lea.vmem %s384, 8 [#allocation0]
    %v391 = vld [vmem:[%s390] sm:$0xff]
    %392 = vperm.xlu0 %4, %v391
    %v393 = vpop.permute.xlu0 %392
    %394 = vst [vmem:[%s389] sm:$0xff] %v393
    %s395 = scalar_lea.vmem [#allocation1], 144
    %s396 = scalar_lea.vmem [#allocation0], 144
    %v397 = vld [vmem:[%s396] sm:$0xff]
    %398 = vperm.xlu0 %4, %v397
    %v399 = vpop.permute.xlu0 %398
    %400 = vst [vmem:[%s395] sm:$0xff] %v399
    %s401 = scalar_lea.vmem %s395, 8 [#allocation1]
    %s402 = scalar_lea.vmem %s396, 8 [#allocation0]
    %v403 = vld [vmem:[%s402] sm:$0xff]
    %404 = vperm.xlu0 %4, %v403
    %v405 = vpop.permute.xlu0 %404
    %406 = vst [vmem:[%s401] sm:$0xff] %v405
    %s407 = scalar_lea.vmem [#allocation1], 160
    %s408 = scalar_lea.vmem [#allocation0], 160
    %v409 = vld [vmem:[%s408] sm:$0xff]
    %410 = vperm.xlu0 %4, %v409
    %v411 = vpop.permute.xlu0 %410
    %412 = vst [vmem:[%s407] sm:$0xff] %v411
    %s413 = scalar_lea.vmem %s407, 8 [#allocation1]
    %s414 = scalar_lea.vmem %s408, 8 [#allocation0]
    %v415 = vld [vmem:[%s414] sm:$0xff]
    %416 = vperm.xlu0 %4, %v415
    %v417 = vpop.permute.xlu0 %416
    %418 = vst [vmem:[%s413] sm:$0xff] %v417
    %s419 = scalar_lea.vmem [#allocation1], 176
    %s420 = scalar_lea.vmem [#allocation0], 176
    %v421 = vld [vmem:[%s420] sm:$0xff]
    %422 = vperm.xlu0 %4, %v421
    %v423 = vpop.permute.xlu0 %422
    %424 = vst [vmem:[%s419] sm:$0xff] %v423
    %s425 = scalar_lea.vmem %s419, 8 [#allocation1]
    %s426 = scalar_lea.vmem %s420, 8 [#allocation0]
    %v427 = vld [vmem:[%s426] sm:$0xff]
    %428 = vperm.xlu0 %4, %v427
    %v429 = vpop.permute.xlu0 %428
    %430 = vst [vmem:[%s425] sm:$0xff] %v429
    %s431 = scalar_lea.vmem [#allocation1], 192
    %s432 = scalar_lea.vmem [#allocation0], 192
    %v433 = vld [vmem:[%s432] sm:$0xff]
    %434 = vperm.xlu0 %4, %v433
    %v435 = vpop.permute.xlu0 %434
    %436 = vst [vmem:[%s431] sm:$0xff] %v435
    %s437 = scalar_lea.vmem %s431, 8 [#allocation1]
    %s438 = scalar_lea.vmem %s432, 8 [#allocation0]
    %v439 = vld [vmem:[%s438] sm:$0xff]
    %440 = vperm.xlu0 %4, %v439
    %v441 = vpop.permute.xlu0 %440
    %442 = vst [vmem:[%s437] sm:$0xff] %v441
    %s443 = scalar_lea.vmem [#allocation1], 208
    %s444 = scalar_lea.vmem [#allocation0], 208
    %v445 = vld [vmem:[%s444] sm:$0xff]
    %446 = vperm.xlu0 %4, %v445
    %v447 = vpop.permute.xlu0 %446
    %448 = vst [vmem:[%s443] sm:$0xff] %v447
    %s449 = scalar_lea.vmem %s443, 8 [#allocation1]
    %s450 = scalar_lea.vmem %s444, 8 [#allocation0]
    %v451 = vld [vmem:[%s450] sm:$0xff]
    %452 = vperm.xlu0 %4, %v451
    %v453 = vpop.permute.xlu0 %452
    %454 = vst [vmem:[%s449] sm:$0xff] %v453
    %s455 = scalar_lea.vmem [#allocation1], 224
    %s456 = scalar_lea.vmem [#allocation0], 224
    %v457 = vld [vmem:[%s456] sm:$0xff]
    %458 = vperm.xlu0 %4, %v457
    %v459 = vpop.permute.xlu0 %458
    %460 = vst [vmem:[%s455] sm:$0xff] %v459
    %s461 = scalar_lea.vmem %s455, 8 [#allocation1]
    %s462 = scalar_lea.vmem %s456, 8 [#allocation0]
    %v463 = vld [vmem:[%s462] sm:$0xff]
    %464 = vperm.xlu0 %4, %v463
    %v465 = vpop.permute.xlu0 %464
    %466 = vst [vmem:[%s461] sm:$0xff] %v465
    %s467 = scalar_lea.vmem [#allocation1], 240
    %s468 = scalar_lea.vmem [#allocation0], 240
    %v469 = vld [vmem:[%s468] sm:$0xff]
    %470 = vperm.xlu0 %4, %v469
    %v471 = vpop.permute.xlu0 %470
    %472 = vst [vmem:[%s467] sm:$0xff] %v471
    %s473 = scalar_lea.vmem %s467, 8 [#allocation1]
    %s474 = scalar_lea.vmem %s468, 8 [#allocation0]
    %v475 = vld [vmem:[%s474] sm:$0xff]
    %476 = vperm.xlu0 %4, %v475
    %v477 = vpop.permute.xlu0 %476
    %478 = vst [vmem:[%s473] sm:$0xff] %v477
    %s479 = scalar_lea.vmem [#allocation1], 256
    %s480 = scalar_lea.vmem [#allocation0], 256
    %v481 = vld [vmem:[%s480] sm:$0xff]
    %482 = vperm.xlu0 %4, %v481
    %v483 = vpop.permute.xlu0 %482
    %484 = vst [vmem:[%s479] sm:$0xff] %v483
    %s485 = scalar_lea.vmem %s479, 8 [#allocation1]
    %s486 = scalar_lea.vmem %s480, 8 [#allocation0]
    %v487 = vld [vmem:[%s486] sm:$0xff]
    %488 = vperm.xlu0 %4, %v487
    %v489 = vpop.permute.xlu0 %488
    %490 = vst [vmem:[%s485] sm:$0xff] %v489
    %s491 = scalar_lea.vmem [#allocation1], 272
    %s492 = scalar_lea.vmem [#allocation0], 272
    %v493 = vld [vmem:[%s492] sm:$0xff]
    %494 = vperm.xlu0 %4, %v493
    %v495 = vpop.permute.xlu0 %494
    %496 = vst [vmem:[%s491] sm:$0xff] %v495
    %s497 = scalar_lea.vmem %s491, 8 [#allocation1]
    %s498 = scalar_lea.vmem %s492, 8 [#allocation0]
    %v499 = vld [vmem:[%s498] sm:$0xff]
    %500 = vperm.xlu0 %4, %v499
    %v501 = vpop.permute.xlu0 %500
    %502 = vst [vmem:[%s497] sm:$0xff] %v501
    %s503 = scalar_lea.vmem [#allocation1], 288
    %s504 = scalar_lea.vmem [#allocation0], 288
    %v505 = vld [vmem:[%s504] sm:$0xff]
    %506 = vperm.xlu0 %4, %v505
    %v507 = vpop.permute.xlu0 %506
    %508 = vst [vmem:[%s503] sm:$0xff] %v507
    %s509 = scalar_lea.vmem %s503, 8 [#allocation1]
    %s510 = scalar_lea.vmem %s504, 8 [#allocation0]
    %v511 = vld [vmem:[%s510] sm:$0xff]
    %512 = vperm.xlu0 %4, %v511
    %v513 = vpop.permute.xlu0 %512
    %514 = vst [vmem:[%s509] sm:$0xff] %v513
    %s515 = scalar_lea.vmem [#allocation1], 304
    %s516 = scalar_lea.vmem [#allocation0], 304
    %v517 = vld [vmem:[%s516] sm:$0xff]
    %518 = vperm.xlu0 %4, %v517
    %v519 = vpop.permute.xlu0 %518
    %520 = vst [vmem:[%s515] sm:$0xff] %v519
    %s521 = scalar_lea.vmem %s515, 8 [#allocation1]
    %s522 = scalar_lea.vmem %s516, 8 [#allocation0]
    %v523 = vld [vmem:[%s522] sm:$0xff]
    %524 = vperm.xlu0 %4, %v523
    %v525 = vpop.permute.xlu0 %524
    %526 = vst [vmem:[%s521] sm:$0xff] %v525
    %s527 = scalar_lea.vmem [#allocation1], 320
    %s528 = scalar_lea.vmem [#allocation0], 320
    %v529 = vld [vmem:[%s528] sm:$0xff]
    %530 = vperm.xlu0 %4, %v529
    %v531 = vpop.permute.xlu0 %530
    %532 = vst [vmem:[%s527] sm:$0xff] %v531
    %s533 = scalar_lea.vmem %s527, 8 [#allocation1]
    %s534 = scalar_lea.vmem %s528, 8 [#allocation0]
    %v535 = vld [vmem:[%s534] sm:$0xff]
    %536 = vperm.xlu0 %4, %v535
    %v537 = vpop.permute.xlu0 %536
    %538 = vst [vmem:[%s533] sm:$0xff] %v537
    %s539 = scalar_lea.vmem [#allocation1], 336
    %s540 = scalar_lea.vmem [#allocation0], 336
    %v541 = vld [vmem:[%s540] sm:$0xff]
    %542 = vperm.xlu0 %4, %v541
    %v543 = vpop.permute.xlu0 %542
    %544 = vst [vmem:[%s539] sm:$0xff] %v543
    %s545 = scalar_lea.vmem %s539, 8 [#allocation1]
    %s546 = scalar_lea.vmem %s540, 8 [#allocation0]
    %v547 = vld [vmem:[%s546] sm:$0xff]
    %548 = vperm.xlu0 %4, %v547
    %v549 = vpop.permute.xlu0 %548
    %550 = vst [vmem:[%s545] sm:$0xff] %v549
    %s551 = scalar_lea.vmem [#allocation1], 352
    %s552 = scalar_lea.vmem [#allocation0], 352
    %v553 = vld [vmem:[%s552] sm:$0xff]
    %554 = vperm.xlu0 %4, %v553
    %v555 = vpop.permute.xlu0 %554
    %556 = vst [vmem:[%s551] sm:$0xff] %v555
    %s557 = scalar_lea.vmem %s551, 8 [#allocation1]
    %s558 = scalar_lea.vmem %s552, 8 [#allocation0]
    %v559 = vld [vmem:[%s558] sm:$0xff]
    %560 = vperm.xlu0 %4, %v559
    %v561 = vpop.permute.xlu0 %560
    %562 = vst [vmem:[%s557] sm:$0xff] %v561
    %s563 = scalar_lea.vmem [#allocation1], 368
    %s564 = scalar_lea.vmem [#allocation0], 368
    %v565 = vld [vmem:[%s564] sm:$0xff]
    %566 = vperm.xlu0 %4, %v565
    %v567 = vpop.permute.xlu0 %566
    %568 = vst [vmem:[%s563] sm:$0xff] %v567
    %s569 = scalar_lea.vmem %s563, 8 [#allocation1]
    %s570 = scalar_lea.vmem %s564, 8 [#allocation0]
    %v571 = vld [vmem:[%s570] sm:$0xff]
    %572 = vperm.xlu0 %4, %v571
    %v573 = vpop.permute.xlu0 %572
    %574 = vst [vmem:[%s569] sm:$0xff] %v573
    %s575 = scalar_lea.vmem [#allocation1], 384
    %s576 = scalar_lea.vmem [#allocation0], 384
    %v577 = vld [vmem:[%s576] sm:$0xff]
    %578 = vperm.xlu0 %4, %v577
    %v579 = vpop.permute.xlu0 %578
    %580 = vst [vmem:[%s575] sm:$0xff] %v579
    %s581 = scalar_lea.vmem %s575, 8 [#allocation1]
    %s582 = scalar_lea.vmem %s576, 8 [#allocation0]
    %v583 = vld [vmem:[%s582] sm:$0xff]
    %584 = vperm.xlu0 %4, %v583
    %v585 = vpop.permute.xlu0 %584
    %586 = vst [vmem:[%s581] sm:$0xff] %v585
    %s587 = scalar_lea.vmem [#allocation1], 400
    %s588 = scalar_lea.vmem [#allocation0], 400
    %v589 = vld [vmem:[%s588] sm:$0xff]
    %590 = vperm.xlu0 %4, %v589
    %v591 = vpop.permute.xlu0 %590
    %592 = vst [vmem:[%s587] sm:$0xff] %v591
    %s593 = scalar_lea.vmem %s587, 8 [#allocation1]
    %s594 = scalar_lea.vmem %s588, 8 [#allocation0]
    %v595 = vld [vmem:[%s594] sm:$0xff]
    %596 = vperm.xlu0 %4, %v595
    %v597 = vpop.permute.xlu0 %596
    %598 = vst [vmem:[%s593] sm:$0xff] %v597
    %s599 = scalar_lea.vmem [#allocation1], 416
    %s600 = scalar_lea.vmem [#allocation0], 416
    %v601 = vld [vmem:[%s600] sm:$0xff]
    %602 = vperm.xlu0 %4, %v601
    %v603 = vpop.permute.xlu0 %602
    %604 = vst [vmem:[%s599] sm:$0xff] %v603
    %s605 = scalar_lea.vmem %s599, 8 [#allocation1]
    %s606 = scalar_lea.vmem %s600, 8 [#allocation0]
    %v607 = vld [vmem:[%s606] sm:$0xff]
    %608 = vperm.xlu0 %4, %v607
    %v609 = vpop.permute.xlu0 %608
    %610 = vst [vmem:[%s605] sm:$0xff] %v609
    %s611 = scalar_lea.vmem [#allocation1], 432
    %s612 = scalar_lea.vmem [#allocation0], 432
    %v613 = vld [vmem:[%s612] sm:$0xff]
    %614 = vperm.xlu0 %4, %v613
    %v615 = vpop.permute.xlu0 %614
    %616 = vst [vmem:[%s611] sm:$0xff] %v615
    %s617 = scalar_lea.vmem %s611, 8 [#allocation1]
    %s618 = scalar_lea.vmem %s612, 8 [#allocation0]
    %v619 = vld [vmem:[%s618] sm:$0xff]
    %620 = vperm.xlu0 %4, %v619
    %v621 = vpop.permute.xlu0 %620
    %622 = vst [vmem:[%s617] sm:$0xff] %v621
    %s623 = scalar_lea.vmem [#allocation1], 448
    %s624 = scalar_lea.vmem [#allocation0], 448
    %v625 = vld [vmem:[%s624] sm:$0xff]
    %626 = vperm.xlu0 %4, %v625
    %v627 = vpop.permute.xlu0 %626
    %628 = vst [vmem:[%s623] sm:$0xff] %v627
    %s629 = scalar_lea.vmem %s623, 8 [#allocation1]
    %s630 = scalar_lea.vmem %s624, 8 [#allocation0]
    %v631 = vld [vmem:[%s630] sm:$0xff]
    %632 = vperm.xlu0 %4, %v631
    %v633 = vpop.permute.xlu0 %632
    %634 = vst [vmem:[%s629] sm:$0xff] %v633
    %s635 = scalar_lea.vmem [#allocation1], 464
    %s636 = scalar_lea.vmem [#allocation0], 464
    %v637 = vld [vmem:[%s636] sm:$0xff]
    %638 = vperm.xlu0 %4, %v637
    %v639 = vpop.permute.xlu0 %638
    %640 = vst [vmem:[%s635] sm:$0xff] %v639
    %s641 = scalar_lea.vmem %s635, 8 [#allocation1]
    %s642 = scalar_lea.vmem %s636, 8 [#allocation0]
    %v643 = vld [vmem:[%s642] sm:$0xff]
    %644 = vperm.xlu0 %4, %v643
    %v645 = vpop.permute.xlu0 %644
    %646 = vst [vmem:[%s641] sm:$0xff] %v645
    %s647 = scalar_lea.vmem [#allocation1], 480
    %s648 = scalar_lea.vmem [#allocation0], 480
    %v649 = vld [vmem:[%s648] sm:$0xff]
    %650 = vperm.xlu0 %4, %v649
    %v651 = vpop.permute.xlu0 %650
    %652 = vst [vmem:[%s647] sm:$0xff] %v651
    %s653 = scalar_lea.vmem %s647, 8 [#allocation1]
    %s654 = scalar_lea.vmem %s648, 8 [#allocation0]
    %v655 = vld [vmem:[%s654] sm:$0xff]
    %656 = vperm.xlu0 %4, %v655
    %v657 = vpop.permute.xlu0 %656
    %658 = vst [vmem:[%s653] sm:$0xff] %v657
    %s659 = scalar_lea.vmem [#allocation1], 496
    %s660 = scalar_lea.vmem [#allocation0], 496
    %v661 = vld [vmem:[%s660] sm:$0xff]
    %662 = vperm.xlu0 %4, %v661
    %v663 = vpop.permute.xlu0 %662
    %664 = vst [vmem:[%s659] sm:$0xff] %v663
    %s665 = scalar_lea.vmem %s659, 8 [#allocation1]
    %s666 = scalar_lea.vmem %s660, 8 [#allocation0]
    %v667 = vld [vmem:[%s666] sm:$0xff]
    %668 = vperm.xlu0 %4, %v667
    %v669 = vpop.permute.xlu0 %668
    %670 = vst [vmem:[%s665] sm:$0xff] %v669
    // Predicated region
    $region36: #{reverse.13} parent=1 // pred_check
      _
    $region37: #{reverse.13} parent=1 // pred_check_branch
      %672 = sbr.rel (0) target = $region39
    $region38: #{reverse.13} parent=1 // pred_region
      // Predicated region
      $region40: #{reverse.13} parent=38 // pred_check
        _
      $region41: #{reverse.13} parent=38 // pred_check_branch
        %674 = sbr.rel (0) target = $region43
      $region42: #{reverse.13} parent=38 // pred_region
        // Predicated region
        $region55: #{reverse.13} parent=42 // pred_check
          _
        $region56: #{reverse.13} parent=42 // pred_check_branch
          %815 = sbr.rel (0) target = $region58
        $region57: #{reverse.13} parent=42 // pred_region
          loop: start=0, step=1, limit=1
          $region59: #{reverse.13} parent=57 // loop_pre_header
            _
          $region60: #{reverse.13} parent=57 // loop_header
            %s817 = sphi 0, %s821
            %p818 = scmp.ge.s32.totalorder %s817, 1
            %s822 = sphi [#allocation1], [#allocation1]
            %s823 = sphi %s1, %s1
          $region61: #{reverse.13} parent=57 // loop_header_branch
            %820 = sbr.rel (%p818) target = $region65
          $region62: #{reverse.13} parent=57 // loop_body
            %v824 = vld [vmem:[%s822] sm:$0xff]
            %825 = vst [vmem:[%s823] sm:$0xff] %v824
            %v826 = vld [vmem:[%s822 + $0x8] sm:$0xff]
            %827 = vst [vmem:[%s823 + $0x8] sm:$0xff] %v826
            %v828 = vld [vmem:[%s822 + $0x10] sm:$0xff]
            %829 = vst [vmem:[%s823 + $0x10] sm:$0xff] %v828
            %v830 = vld [vmem:[%s822 + $0x18] sm:$0xff]
            %831 = vst [vmem:[%s823 + $0x18] sm:$0xff] %v830
            %v832 = vld [vmem:[%s822 + $0x20] sm:$0xff]
            %833 = vst [vmem:[%s823 + $0x20] sm:$0xff] %v832
            %v834 = vld [vmem:[%s822 + $0x28] sm:$0xff]
            %835 = vst [vmem:[%s823 + $0x28] sm:$0xff] %v834
            %v836 = vld [vmem:[%s822 + $0x30] sm:$0xff]
            %837 = vst [vmem:[%s823 + $0x30] sm:$0xff] %v836
            %v838 = vld [vmem:[%s822 + $0x38] sm:$0xff]
            %839 = vst [vmem:[%s823 + $0x38] sm:$0xff] %v838
            %v840 = vld [vmem:[%s822 + $0x40] sm:$0xff]
            %841 = vst [vmem:[%s823 + $0x40] sm:$0xff] %v840
            %v842 = vld [vmem:[%s822 + $0x48] sm:$0xff]
            %843 = vst [vmem:[%s823 + $0x48] sm:$0xff] %v842
            %v844 = vld [vmem:[%s822 + $0x50] sm:$0xff]
            %845 = vst [vmem:[%s823 + $0x50] sm:$0xff] %v844
            %v846 = vld [vmem:[%s822 + $0x58] sm:$0xff]
            %847 = vst [vmem:[%s823 + $0x58] sm:$0xff] %v846
            %v848 = vld [vmem:[%s822 + $0x60] sm:$0xff]
            %849 = vst [vmem:[%s823 + $0x60] sm:$0xff] %v848
            %v850 = vld [vmem:[%s822 + $0x68] sm:$0xff]
            %851 = vst [vmem:[%s823 + $0x68] sm:$0xff] %v850
            %v852 = vld [vmem:[%s822 + $0x70] sm:$0xff]
            %853 = vst [vmem:[%s823 + $0x70] sm:$0xff] %v852
            %v854 = vld [vmem:[%s822 + $0x78] sm:$0xff]
            %855 = vst [vmem:[%s823 + $0x78] sm:$0xff] %v854
            %v856 = vld [vmem:[%s822 + $0x80] sm:$0xff]
            %857 = vst [vmem:[%s823 + $0x80] sm:$0xff] %v856
            %v858 = vld [vmem:[%s822 + $0x88] sm:$0xff]
            %859 = vst [vmem:[%s823 + $0x88] sm:$0xff] %v858
            %v860 = vld [vmem:[%s822 + $0x90] sm:$0xff]
            %861 = vst [vmem:[%s823 + $0x90] sm:$0xff] %v860
            %v862 = vld [vmem:[%s822 + $0x98] sm:$0xff]
            %863 = vst [vmem:[%s823 + $0x98] sm:$0xff] %v862
            %v864 = vld [vmem:[%s822 + $0xa0] sm:$0xff]
            %865 = vst [vmem:[%s823 + $0xa0] sm:$0xff] %v864
            %v866 = vld [vmem:[%s822 + $0xa8] sm:$0xff]
            %867 = vst [vmem:[%s823 + $0xa8] sm:$0xff] %v866
            %v868 = vld [vmem:[%s822 + $0xb0] sm:$0xff]
            %869 = vst [vmem:[%s823 + $0xb0] sm:$0xff] %v868
            %v870 = vld [vmem:[%s822 + $0xb8] sm:$0xff]
            %871 = vst [vmem:[%s823 + $0xb8] sm:$0xff] %v870
            %v872 = vld [vmem:[%s822 + $0xc0] sm:$0xff]
            %873 = vst [vmem:[%s823 + $0xc0] sm:$0xff] %v872
            %v874 = vld [vmem:[%s822 + $0xc8] sm:$0xff]
            %875 = vst [vmem:[%s823 + $0xc8] sm:$0xff] %v874
            %v876 = vld [vmem:[%s822 + $0xd0] sm:$0xff]
            %877 = vst [vmem:[%s823 + $0xd0] sm:$0xff] %v876
            %v878 = vld [vmem:[%s822 + $0xd8] sm:$0xff]
            %879 = vst [vmem:[%s823 + $0xd8] sm:$0xff] %v878
            %v880 = vld [vmem:[%s822 + $0xe0] sm:$0xff]
            %881 = vst [vmem:[%s823 + $0xe0] sm:$0xff] %v880
            %v882 = vld [vmem:[%s822 + $0xe8] sm:$0xff]
            %883 = vst [vmem:[%s823 + $0xe8] sm:$0xff] %v882
            %v884 = vld [vmem:[%s822 + $0xf0] sm:$0xff]
            %885 = vst [vmem:[%s823 + $0xf0] sm:$0xff] %v884
            %v886 = vld [vmem:[%s822 + $0xf8] sm:$0xff]
            %887 = vst [vmem:[%s823 + $0xf8] sm:$0xff] %v886
            %v888 = vld [vmem:[%s822 + $0x100] sm:$0xff]
            %889 = vst [vmem:[%s823 + $0x100] sm:$0xff] %v888
            %v890 = vld [vmem:[%s822 + $0x108] sm:$0xff]
            %891 = vst [vmem:[%s823 + $0x108] sm:$0xff] %v890
            %v892 = vld [vmem:[%s822 + $0x110] sm:$0xff]
            %893 = vst [vmem:[%s823 + $0x110] sm:$0xff] %v892
            %v894 = vld [vmem:[%s822 + $0x118] sm:$0xff]
            %895 = vst [vmem:[%s823 + $0x118] sm:$0xff] %v894
            %v896 = vld [vmem:[%s822 + $0x120] sm:$0xff]
            %897 = vst [vmem:[%s823 + $0x120] sm:$0xff] %v896
            %v898 = vld [vmem:[%s822 + $0x128] sm:$0xff]
            %899 = vst [vmem:[%s823 + $0x128] sm:$0xff] %v898
            %v900 = vld [vmem:[%s822 + $0x130] sm:$0xff]
            %901 = vst [vmem:[%s823 + $0x130] sm:$0xff] %v900
            %v902 = vld [vmem:[%s822 + $0x138] sm:$0xff]
            %903 = vst [vmem:[%s823 + $0x138] sm:$0xff] %v902
            %v904 = vld [vmem:[%s822 + $0x140] sm:$0xff]
            %905 = vst [vmem:[%s823 + $0x140] sm:$0xff] %v904
            %v906 = vld [vmem:[%s822 + $0x148] sm:$0xff]
            %907 = vst [vmem:[%s823 + $0x148] sm:$0xff] %v906
            %v908 = vld [vmem:[%s822 + $0x150] sm:$0xff]
            %909 = vst [vmem:[%s823 + $0x150] sm:$0xff] %v908
            %v910 = vld [vmem:[%s822 + $0x158] sm:$0xff]
            %911 = vst [vmem:[%s823 + $0x158] sm:$0xff] %v910
            %v912 = vld [vmem:[%s822 + $0x160] sm:$0xff]
            %913 = vst [vmem:[%s823 + $0x160] sm:$0xff] %v912
            %v914 = vld [vmem:[%s822 + $0x168] sm:$0xff]
            %915 = vst [vmem:[%s823 + $0x168] sm:$0xff] %v914
            %v916 = vld [vmem:[%s822 + $0x170] sm:$0xff]
            %917 = vst [vmem:[%s823 + $0x170] sm:$0xff] %v916
            %v918 = vld [vmem:[%s822 + $0x178] sm:$0xff]
            %919 = vst [vmem:[%s823 + $0x178] sm:$0xff] %v918
            %v920 = vld [vmem:[%s822 + $0x180] sm:$0xff]
            %921 = vst [vmem:[%s823 + $0x180] sm:$0xff] %v920
            %v922 = vld [vmem:[%s822 + $0x188] sm:$0xff]
            %923 = vst [vmem:[%s823 + $0x188] sm:$0xff] %v922
            %v924 = vld [vmem:[%s822 + $0x190] sm:$0xff]
            %925 = vst [vmem:[%s823 + $0x190] sm:$0xff] %v924
            %v926 = vld [vmem:[%s822 + $0x198] sm:$0xff]
            %927 = vst [vmem:[%s823 + $0x198] sm:$0xff] %v926
            %v928 = vld [vmem:[%s822 + $0x1a0] sm:$0xff]
            %929 = vst [vmem:[%s823 + $0x1a0] sm:$0xff] %v928
            %v930 = vld [vmem:[%s822 + $0x1a8] sm:$0xff]
            %931 = vst [vmem:[%s823 + $0x1a8] sm:$0xff] %v930
            %v932 = vld [vmem:[%s822 + $0x1b0] sm:$0xff]
            %933 = vst [vmem:[%s823 + $0x1b0] sm:$0xff] %v932
            %v934 = vld [vmem:[%s822 + $0x1b8] sm:$0xff]
            %935 = vst [vmem:[%s823 + $0x1b8] sm:$0xff] %v934
            %v936 = vld [vmem:[%s822 + $0x1c0] sm:$0xff]
            %937 = vst [vmem:[%s823 + $0x1c0] sm:$0xff] %v936
            %v938 = vld [vmem:[%s822 + $0x1c8] sm:$0xff]
            %939 = vst [vmem:[%s823 + $0x1c8] sm:$0xff] %v938
            %v940 = vld [vmem:[%s822 + $0x1d0] sm:$0xff]
            %941 = vst [vmem:[%s823 + $0x1d0] sm:$0xff] %v940
            %v942 = vld [vmem:[%s822 + $0x1d8] sm:$0xff]
            %943 = vst [vmem:[%s823 + $0x1d8] sm:$0xff] %v942
            %v944 = vld [vmem:[%s822 + $0x1e0] sm:$0xff]
            %945 = vst [vmem:[%s823 + $0x1e0] sm:$0xff] %v944
            %v946 = vld [vmem:[%s822 + $0x1e8] sm:$0xff]
            %947 = vst [vmem:[%s823 + $0x1e8] sm:$0xff] %v946
            %v948 = vld [vmem:[%s822 + $0x1f0] sm:$0xff]
            %949 = vst [vmem:[%s823 + $0x1f0] sm:$0xff] %v948
            %v950 = vld [vmem:[%s822 + $0x1f8] sm:$0xff]
            %951 = vst [vmem:[%s823 + $0x1f8] sm:$0xff] %v950
          $region63: #{reverse.13} parent=57 // loop_footer
            %s821 = sadd.s32 1, %s817
          $region64: #{reverse.13} parent=57 // loop_footer_branch
            %816 = sbr.rel target = $region60
          $region65: #{reverse.13} parent=57 // loop_exit
            _
        $region58: #{reverse.13} parent=42 // pred_fallthru
          _
        // Predicated region
        $region66: #{reverse.13} parent=42 // pred_check
          _
        $region67: #{reverse.13} parent=42 // pred_check_branch
          %953 = sbr.rel target = $region69
        $region68: #{reverse.13} parent=42 // pred_region
          _
        $region69: #{reverse.13} parent=42 // pred_fallthru
          _
      $region43: #{reverse.13} parent=38 // pred_fallthru
        _
      // Predicated region
      $region44: #{reverse.13} parent=38 // pred_check
        _
      $region45: #{reverse.13} parent=38 // pred_check_branch
        %676 = sbr.rel target = $region47
      $region46: #{reverse.13} parent=38 // pred_region
        loop: start=0, step=1, limit=1
        $region48: #{reverse.13} parent=46 // loop_pre_header
          _
        $region49: #{reverse.13} parent=46 // loop_header
          %s679 = sphi 0, %s683
          %p680 = scmp.ge.s32.totalorder %s679, 1
          %s684 = sphi [#allocation1], [#allocation1]
          %s685 = sphi %s1, %s1
        $region50: #{reverse.13} parent=46 // loop_header_branch
          %682 = sbr.rel (%p680) target = $region54
        $region51: #{reverse.13} parent=46 // loop_body
          %v686 = vld [vmem:[%s684] sm:$0xff]
          %687 = vst [vmem:[%s685] sm:$0xff] %v686
          %v688 = vld [vmem:[%s684 + $0x8] sm:$0xff]
          %689 = vst [vmem:[%s685 + $0x8] sm:$0xff] %v688
          %v690 = vld [vmem:[%s684 + $0x10] sm:$0xff]
          %691 = vst [vmem:[%s685 + $0x10] sm:$0xff] %v690
          %v692 = vld [vmem:[%s684 + $0x18] sm:$0xff]
          %693 = vst [vmem:[%s685 + $0x18] sm:$0xff] %v692
          %v694 = vld [vmem:[%s684 + $0x20] sm:$0xff]
          %695 = vst [vmem:[%s685 + $0x20] sm:$0xff] %v694
          %v696 = vld [vmem:[%s684 + $0x28] sm:$0xff]
          %697 = vst [vmem:[%s685 + $0x28] sm:$0xff] %v696
          %v698 = vld [vmem:[%s684 + $0x30] sm:$0xff]
          %699 = vst [vmem:[%s685 + $0x30] sm:$0xff] %v698
          %v700 = vld [vmem:[%s684 + $0x38] sm:$0xff]
          %701 = vst [vmem:[%s685 + $0x38] sm:$0xff] %v700
          %v702 = vld [vmem:[%s684 + $0x40] sm:$0xff]
          %703 = vst [vmem:[%s685 + $0x40] sm:$0xff] %v702
          %v704 = vld [vmem:[%s684 + $0x48] sm:$0xff]
          %705 = vst [vmem:[%s685 + $0x48] sm:$0xff] %v704
          %v706 = vld [vmem:[%s684 + $0x50] sm:$0xff]
          %707 = vst [vmem:[%s685 + $0x50] sm:$0xff] %v706
          %v708 = vld [vmem:[%s684 + $0x58] sm:$0xff]
          %709 = vst [vmem:[%s685 + $0x58] sm:$0xff] %v708
          %v710 = vld [vmem:[%s684 + $0x60] sm:$0xff]
          %711 = vst [vmem:[%s685 + $0x60] sm:$0xff] %v710
          %v712 = vld [vmem:[%s684 + $0x68] sm:$0xff]
          %713 = vst [vmem:[%s685 + $0x68] sm:$0xff] %v712
          %v714 = vld [vmem:[%s684 + $0x70] sm:$0xff]
          %715 = vst [vmem:[%s685 + $0x70] sm:$0xff] %v714
          %v716 = vld [vmem:[%s684 + $0x78] sm:$0xff]
          %717 = vst [vmem:[%s685 + $0x78] sm:$0xff] %v716
          %v718 = vld [vmem:[%s684 + $0x80] sm:$0xff]
          %719 = vst [vmem:[%s685 + $0x80] sm:$0xff] %v718
          %v720 = vld [vmem:[%s684 + $0x88] sm:$0xff]
          %721 = vst [vmem:[%s685 + $0x88] sm:$0xff] %v720
          %v722 = vld [vmem:[%s684 + $0x90] sm:$0xff]
          %723 = vst [vmem:[%s685 + $0x90] sm:$0xff] %v722
          %v724 = vld [vmem:[%s684 + $0x98] sm:$0xff]
          %725 = vst [vmem:[%s685 + $0x98] sm:$0xff] %v724
          %v726 = vld [vmem:[%s684 + $0xa0] sm:$0xff]
          %727 = vst [vmem:[%s685 + $0xa0] sm:$0xff] %v726
          %v728 = vld [vmem:[%s684 + $0xa8] sm:$0xff]
          %729 = vst [vmem:[%s685 + $0xa8] sm:$0xff] %v728
          %v730 = vld [vmem:[%s684 + $0xb0] sm:$0xff]
          %731 = vst [vmem:[%s685 + $0xb0] sm:$0xff] %v730
          %v732 = vld [vmem:[%s684 + $0xb8] sm:$0xff]
          %733 = vst [vmem:[%s685 + $0xb8] sm:$0xff] %v732
          %v734 = vld [vmem:[%s684 + $0xc0] sm:$0xff]
          %735 = vst [vmem:[%s685 + $0xc0] sm:$0xff] %v734
          %v736 = vld [vmem:[%s684 + $0xc8] sm:$0xff]
          %737 = vst [vmem:[%s685 + $0xc8] sm:$0xff] %v736
          %v738 = vld [vmem:[%s684 + $0xd0] sm:$0xff]
          %739 = vst [vmem:[%s685 + $0xd0] sm:$0xff] %v738
          %v740 = vld [vmem:[%s684 + $0xd8] sm:$0xff]
          %741 = vst [vmem:[%s685 + $0xd8] sm:$0xff] %v740
          %v742 = vld [vmem:[%s684 + $0xe0] sm:$0xff]
          %743 = vst [vmem:[%s685 + $0xe0] sm:$0xff] %v742
          %v744 = vld [vmem:[%s684 + $0xe8] sm:$0xff]
          %745 = vst [vmem:[%s685 + $0xe8] sm:$0xff] %v744
          %v746 = vld [vmem:[%s684 + $0xf0] sm:$0xff]
          %747 = vst [vmem:[%s685 + $0xf0] sm:$0xff] %v746
          %v748 = vld [vmem:[%s684 + $0xf8] sm:$0xff]
          %749 = vst [vmem:[%s685 + $0xf8] sm:$0xff] %v748
          %v750 = vld [vmem:[%s684 + $0x100] sm:$0xff]
          %751 = vst [vmem:[%s685 + $0x100] sm:$0xff] %v750
          %v752 = vld [vmem:[%s684 + $0x108] sm:$0xff]
          %753 = vst [vmem:[%s685 + $0x108] sm:$0xff] %v752
          %v754 = vld [vmem:[%s684 + $0x110] sm:$0xff]
          %755 = vst [vmem:[%s685 + $0x110] sm:$0xff] %v754
          %v756 = vld [vmem:[%s684 + $0x118] sm:$0xff]
          %757 = vst [vmem:[%s685 + $0x118] sm:$0xff] %v756
          %v758 = vld [vmem:[%s684 + $0x120] sm:$0xff]
          %759 = vst [vmem:[%s685 + $0x120] sm:$0xff] %v758
          %v760 = vld [vmem:[%s684 + $0x128] sm:$0xff]
          %761 = vst [vmem:[%s685 + $0x128] sm:$0xff] %v760
          %v762 = vld [vmem:[%s684 + $0x130] sm:$0xff]
          %763 = vst [vmem:[%s685 + $0x130] sm:$0xff] %v762
          %v764 = vld [vmem:[%s684 + $0x138] sm:$0xff]
          %765 = vst [vmem:[%s685 + $0x138] sm:$0xff] %v764
          %v766 = vld [vmem:[%s684 + $0x140] sm:$0xff]
          %767 = vst [vmem:[%s685 + $0x140] sm:$0xff] %v766
          %v768 = vld [vmem:[%s684 + $0x148] sm:$0xff]
          %769 = vst [vmem:[%s685 + $0x148] sm:$0xff] %v768
          %v770 = vld [vmem:[%s684 + $0x150] sm:$0xff]
          %771 = vst [vmem:[%s685 + $0x150] sm:$0xff] %v770
          %v772 = vld [vmem:[%s684 + $0x158] sm:$0xff]
          %773 = vst [vmem:[%s685 + $0x158] sm:$0xff] %v772
          %v774 = vld [vmem:[%s684 + $0x160] sm:$0xff]
          %775 = vst [vmem:[%s685 + $0x160] sm:$0xff] %v774
          %v776 = vld [vmem:[%s684 + $0x168] sm:$0xff]
          %777 = vst [vmem:[%s685 + $0x168] sm:$0xff] %v776
          %v778 = vld [vmem:[%s684 + $0x170] sm:$0xff]
          %779 = vst [vmem:[%s685 + $0x170] sm:$0xff] %v778
          %v780 = vld [vmem:[%s684 + $0x178] sm:$0xff]
          %781 = vst [vmem:[%s685 + $0x178] sm:$0xff] %v780
          %v782 = vld [vmem:[%s684 + $0x180] sm:$0xff]
          %783 = vst [vmem:[%s685 + $0x180] sm:$0xff] %v782
          %v784 = vld [vmem:[%s684 + $0x188] sm:$0xff]
          %785 = vst [vmem:[%s685 + $0x188] sm:$0xff] %v784
          %v786 = vld [vmem:[%s684 + $0x190] sm:$0xff]
          %787 = vst [vmem:[%s685 + $0x190] sm:$0xff] %v786
          %v788 = vld [vmem:[%s684 + $0x198] sm:$0xff]
          %789 = vst [vmem:[%s685 + $0x198] sm:$0xff] %v788
          %v790 = vld [vmem:[%s684 + $0x1a0] sm:$0xff]
          %791 = vst [vmem:[%s685 + $0x1a0] sm:$0xff] %v790
          %v792 = vld [vmem:[%s684 + $0x1a8] sm:$0xff]
          %793 = vst [vmem:[%s685 + $0x1a8] sm:$0xff] %v792
          %v794 = vld [vmem:[%s684 + $0x1b0] sm:$0xff]
          %795 = vst [vmem:[%s685 + $0x1b0] sm:$0xff] %v794
          %v796 = vld [vmem:[%s684 + $0x1b8] sm:$0xff]
          %797 = vst [vmem:[%s685 + $0x1b8] sm:$0xff] %v796
          %v798 = vld [vmem:[%s684 + $0x1c0] sm:$0xff]
          %799 = vst [vmem:[%s685 + $0x1c0] sm:$0xff] %v798
          %v800 = vld [vmem:[%s684 + $0x1c8] sm:$0xff]
          %801 = vst [vmem:[%s685 + $0x1c8] sm:$0xff] %v800
          %v802 = vld [vmem:[%s684 + $0x1d0] sm:$0xff]
          %803 = vst [vmem:[%s685 + $0x1d0] sm:$0xff] %v802
          %v804 = vld [vmem:[%s684 + $0x1d8] sm:$0xff]
          %805 = vst [vmem:[%s685 + $0x1d8] sm:$0xff] %v804
          %v806 = vld [vmem:[%s684 + $0x1e0] sm:$0xff]
          %807 = vst [vmem:[%s685 + $0x1e0] sm:$0xff] %v806
          %v808 = vld [vmem:[%s684 + $0x1e8] sm:$0xff]
          %809 = vst [vmem:[%s685 + $0x1e8] sm:$0xff] %v808
          %v810 = vld [vmem:[%s684 + $0x1f0] sm:$0xff]
          %811 = vst [vmem:[%s685 + $0x1f0] sm:$0xff] %v810
          %v812 = vld [vmem:[%s684 + $0x1f8] sm:$0xff]
          %813 = vst [vmem:[%s685 + $0x1f8] sm:$0xff] %v812
        $region52: #{reverse.13} parent=46 // loop_footer
          %s683 = sadd.s32 1, %s679
        $region53: #{reverse.13} parent=46 // loop_footer_branch
          %678 = sbr.rel target = $region49
        $region54: #{reverse.13} parent=46 // loop_exit
          _
      $region47: #{reverse.13} parent=38 // pred_fallthru
        _
    $region39: #{reverse.13} parent=1 // pred_fallthru
      _
    %954 = vnop

// kernel: reverse.17
$region0: #{reverse.17}
  %s0 = inlined_call_operand.vmem [shape: f32[2,2,4,16,256], index: 0, kind: input, shape index: {}]
  %s1 = inlined_call_operand.vmem [shape: f32[2,2,4,16,256], index: 1, kind: output, shape index: {}]
  %v2 = vlaneseq
  %v3 = vsub.s32 127, %v2
  %4 = vset.pattern.permute.xlu0 %v3
  $region1: #{reverse.17} parent=0
    #allocation0 [shape = 'u8[262144]{0}', space=vmem, size = 0x40000, scoped, tag = 'operand span for operand 0']
    #allocation1 [shape = 'u8[262144]{0}', space=vmem, size = 0x40000, scoped, tag = 'operand span for operand 1']
    loop: start=0, step=1, limit=4
    $region2: #{reverse.17} parent=1 // loop_pre_header
      _
    $region3: #{reverse.17} parent=1 // loop_header
      %s6 = sphi 0, %s10
      %p7 = scmp.ge.s32.totalorder %s6, 4
      %s13 = sphi 0, %s46
      %s14 = sphi 0, %s42
      %s15 = sphi 0, %s38
      %s16 = sphi 0, %s34
      %s17 = sphi 0, %s30
      %s18 = sphi 0, %s13
      %s19 = sphi 0, %s14
      %s20 = sphi 0, %s15
      %s21 = sphi 0, %s16
      %s22 = sphi 0, %s17
      %s23 = sphi 0, %s18
      %s24 = sphi 0, %s19
      %s25 = sphi 0, %s20
      %s26 = sphi 0, %s21
      %s27 = sphi 0, %s22
    $region4: #{reverse.17} parent=1 // loop_header_branch
      %9 = sbr.rel (%p7) target = $region8
    $region5: #{reverse.17} parent=1 // loop_body
      %s11 = ssub.s32 %s6, 1
      %s12 = ssub.s32 %s6, 2
      %s28 = sadd.s32 1, %s17
      %p29 = scmp.ge.s32.totalorder %s28, 2
      %s30 = scalar_select %p29, 0, %s28
      %s31 = sadd.s32 1, %s16
      %s32 = scalar_select %p29, %s31, %s16
      %p33 = scmp.ge.s32.totalorder %s32, 1
      %s34 = scalar_select %p33, 0, %s32
      %s35 = sadd.s32 1, %s15
      %s36 = scalar_select %p33, %s35, %s15
      %p37 = scmp.ge.s32.totalorder %s36, 1
      %s38 = scalar_select %p37, 0, %s36
      %s39 = sadd.s32 1, %s14
      %s40 = scalar_select %p37, %s39, %s14
      %p41 = scmp.ge.s32.totalorder %s40, 1
      %s42 = scalar_select %p41, 0, %s40
      %s43 = sadd.s32 1, %s13
      %s44 = scalar_select %p41, %s43, %s13
      %p45 = scmp.ge.s32.totalorder %s44, 1
      %s46 = scalar_select %p45, 0, %s44
      %p47 = scmp.le.s32.totalorder 1, %s6
      %p48 = scmp.lt.s32.totalorder %s6, 3
      %p49 = pnand %p47, %p48
      %p50 = pneg %p49
      // Predicated region
      $region9: #{reverse.17} parent=5 // pred_check
        _
      $region10: #{reverse.17} parent=5 // pred_check_branch
        %52 = sbr.rel (%p49) target = $region12
      $region11: #{reverse.17} parent=5 // pred_region
        %s53 = ssub.s32 %s6, 1
      $region12: #{reverse.17} parent=5 // pred_fallthru
        _
      %p54 = scmp.lt.s32.totalorder %s6, 2
      // Predicated region
      $region13: #{reverse.17} parent=5 // pred_check
        %p55 = pneg %p54
      $region14: #{reverse.17} parent=5 // pred_check_branch
        %57 = sbr.rel (%p55) target = $region16
      $region15: #{reverse.17} parent=5 // pred_region
        %s58 = sand.u32 %s6, 1
        %s59 = sand.u32 %s6, 1
        %s60 = smul.addr %s59, 256
        %s61 = scalar_lea.vmem [#allocation0], %s60
        %s62 = ssub.s32 1, %s17
        %s63 = smul.u32 2, %s13
        %s64 = smul.u32 2, %s14
        %s65 = smul.u32 4, %s15
        %s66 = smul.u32 2, %s16
        %s67 = smul.addr %s66, 2
        %s68 = sadd.s32 %s62, %s67
        %s69 = smul.addr %s65, 4
        %s70 = sadd.s32 %s68, %s69
        %s71 = smul.addr %s64, 16
        %s72 = sadd.s32 %s70, %s71
        %s73 = smul.addr %s63, 32
        %s74 = sadd.s32 %s72, %s73
        %s75 = smul.addr %s74, 8
        %s76 = scalar_lea.vmem %s0, %s75
        // Predicated region
        $region17: #{reverse.17} parent=15 // pred_check
          _
        $region18: #{reverse.17} parent=15 // pred_check_branch
          %78 = sbr.rel (0) target = $region20
        $region19: #{reverse.17} parent=15 // pred_region
          // Predicated region
          $region21: #{reverse.17} parent=19 // pred_check
            _
          $region22: #{reverse.17} parent=19 // pred_check_branch
            %80 = sbr.rel (0) target = $region24
          $region23: #{reverse.17} parent=19 // pred_region
            // Predicated region
            $region36: #{reverse.17} parent=23 // pred_check
              _
            $region37: #{reverse.17} parent=23 // pred_check_branch
              %157 = sbr.rel (0) target = $region39
            $region38: #{reverse.17} parent=23 // pred_region
              loop: start=0, step=1, limit=1
              $region40: #{reverse.17} parent=38 // loop_pre_header
                _
              $region41: #{reverse.17} parent=38 // loop_header
                %s159 = sphi 0, %s163
                %p160 = scmp.ge.s32.totalorder %s159, 1
                %s164 = sphi %s76, %s76
                %s165 = sphi %s61, %s61
              $region42: #{reverse.17} parent=38 // loop_header_branch
                %162 = sbr.rel (%p160) target = $region46
              $region43: #{reverse.17} parent=38 // loop_body
                %v166 = vld [vmem:[%s164] sm:$0xff]
                %167 = vst [vmem:[%s165] sm:$0xff] %v166
                %v168 = vld [vmem:[%s164 + $0x10] sm:$0xff]
                %169 = vst [vmem:[%s165 + $0x8] sm:$0xff] %v168
                %v170 = vld [vmem:[%s164 + $0x20] sm:$0xff]
                %171 = vst [vmem:[%s165 + $0x10] sm:$0xff] %v170
                %v172 = vld [vmem:[%s164 + $0x30] sm:$0xff]
                %173 = vst [vmem:[%s165 + $0x18] sm:$0xff] %v172
                %v174 = vld [vmem:[%s164 + $0x40] sm:$0xff]
                %175 = vst [vmem:[%s165 + $0x20] sm:$0xff] %v174
                %v176 = vld [vmem:[%s164 + $0x50] sm:$0xff]
                %177 = vst [vmem:[%s165 + $0x28] sm:$0xff] %v176
                %v178 = vld [vmem:[%s164 + $0x60] sm:$0xff]
                %179 = vst [vmem:[%s165 + $0x30] sm:$0xff] %v178
                %v180 = vld [vmem:[%s164 + $0x70] sm:$0xff]
                %181 = vst [vmem:[%s165 + $0x38] sm:$0xff] %v180
                %v182 = vld [vmem:[%s164 + $0x80] sm:$0xff]
                %183 = vst [vmem:[%s165 + $0x40] sm:$0xff] %v182
                %v184 = vld [vmem:[%s164 + $0x90] sm:$0xff]
                %185 = vst [vmem:[%s165 + $0x48] sm:$0xff] %v184
                %v186 = vld [vmem:[%s164 + $0xa0] sm:$0xff]
                %187 = vst [vmem:[%s165 + $0x50] sm:$0xff] %v186
                %v188 = vld [vmem:[%s164 + $0xb0] sm:$0xff]
                %189 = vst [vmem:[%s165 + $0x58] sm:$0xff] %v188
                %v190 = vld [vmem:[%s164 + $0xc0] sm:$0xff]
                %191 = vst [vmem:[%s165 + $0x60] sm:$0xff] %v190
                %v192 = vld [vmem:[%s164 + $0xd0] sm:$0xff]
                %193 = vst [vmem:[%s165 + $0x68] sm:$0xff] %v192
                %v194 = vld [vmem:[%s164 + $0xe0] sm:$0xff]
                %195 = vst [vmem:[%s165 + $0x70] sm:$0xff] %v194
                %v196 = vld [vmem:[%s164 + $0xf0] sm:$0xff]
                %197 = vst [vmem:[%s165 + $0x78] sm:$0xff] %v196
                %v198 = vld [vmem:[%s164 + $0x100] sm:$0xff]
                %199 = vst [vmem:[%s165 + $0x80] sm:$0xff] %v198
                %v200 = vld [vmem:[%s164 + $0x110] sm:$0xff]
                %201 = vst [vmem:[%s165 + $0x88] sm:$0xff] %v200
                %v202 = vld [vmem:[%s164 + $0x120] sm:$0xff]
                %203 = vst [vmem:[%s165 + $0x90] sm:$0xff] %v202
                %v204 = vld [vmem:[%s164 + $0x130] sm:$0xff]
                %205 = vst [vmem:[%s165 + $0x98] sm:$0xff] %v204
                %v206 = vld [vmem:[%s164 + $0x140] sm:$0xff]
                %207 = vst [vmem:[%s165 + $0xa0] sm:$0xff] %v206
                %v208 = vld [vmem:[%s164 + $0x150] sm:$0xff]
                %209 = vst [vmem:[%s165 + $0xa8] sm:$0xff] %v208
                %v210 = vld [vmem:[%s164 + $0x160] sm:$0xff]
                %211 = vst [vmem:[%s165 + $0xb0] sm:$0xff] %v210
                %v212 = vld [vmem:[%s164 + $0x170] sm:$0xff]
                %213 = vst [vmem:[%s165 + $0xb8] sm:$0xff] %v212
                %v214 = vld [vmem:[%s164 + $0x180] sm:$0xff]
                %215 = vst [vmem:[%s165 + $0xc0] sm:$0xff] %v214
                %v216 = vld [vmem:[%s164 + $0x190] sm:$0xff]
                %217 = vst [vmem:[%s165 + $0xc8] sm:$0xff] %v216
                %v218 = vld [vmem:[%s164 + $0x1a0] sm:$0xff]
                %219 = vst [vmem:[%s165 + $0xd0] sm:$0xff] %v218
                %v220 = vld [vmem:[%s164 + $0x1b0] sm:$0xff]
                %221 = vst [vmem:[%s165 + $0xd8] sm:$0xff] %v220
                %v222 = vld [vmem:[%s164 + $0x1c0] sm:$0xff]
                %223 = vst [vmem:[%s165 + $0xe0] sm:$0xff] %v222
                %v224 = vld [vmem:[%s164 + $0x1d0] sm:$0xff]
                %225 = vst [vmem:[%s165 + $0xe8] sm:$0xff] %v224
                %v226 = vld [vmem:[%s164 + $0x1e0] sm:$0xff]
                %227 = vst [vmem:[%s165 + $0xf0] sm:$0xff] %v226
                %v228 = vld [vmem:[%s164 + $0x1f0] sm:$0xff]
                %229 = vst [vmem:[%s165 + $0xf8] sm:$0xff] %v228
              $region44: #{reverse.17} parent=38 // loop_footer
                %s163 = sadd.s32 1, %s159
              $region45: #{reverse.17} parent=38 // loop_footer_branch
                %158 = sbr.rel target = $region41
              $region46: #{reverse.17} parent=38 // loop_exit
                _
            $region39: #{reverse.17} parent=23 // pred_fallthru
              _
            // Predicated region
            $region47: #{reverse.17} parent=23 // pred_check
              _
            $region48: #{reverse.17} parent=23 // pred_check_branch
              %231 = sbr.rel target = $region50
            $region49: #{reverse.17} parent=23 // pred_region
              _
            $region50: #{reverse.17} parent=23 // pred_fallthru
              _
          $region24: #{reverse.17} parent=19 // pred_fallthru
            _
          // Predicated region
          $region25: #{reverse.17} parent=19 // pred_check
            _
          $region26: #{reverse.17} parent=19 // pred_check_branch
            %82 = sbr.rel target = $region28
          $region27: #{reverse.17} parent=19 // pred_region
            loop: start=0, step=1, limit=1
            $region29: #{reverse.17} parent=27 // loop_pre_header
              _
            $region30: #{reverse.17} parent=27 // loop_header
              %s85 = sphi 0, %s89
              %p86 = scmp.ge.s32.totalorder %s85, 1
              %s90 = sphi %s76, %s76
              %s91 = sphi %s61, %s61
            $region31: #{reverse.17} parent=27 // loop_header_branch
              %88 = sbr.rel (%p86) target = $region35
            $region32: #{reverse.17} parent=27 // loop_body
              %v92 = vld [vmem:[%s90] sm:$0xff]
              %93 = vst [vmem:[%s91] sm:$0xff] %v92
              %v94 = vld [vmem:[%s90 + $0x10] sm:$0xff]
              %95 = vst [vmem:[%s91 + $0x8] sm:$0xff] %v94
              %v96 = vld [vmem:[%s90 + $0x20] sm:$0xff]
              %97 = vst [vmem:[%s91 + $0x10] sm:$0xff] %v96
              %v98 = vld [vmem:[%s90 + $0x30] sm:$0xff]
              %99 = vst [vmem:[%s91 + $0x18] sm:$0xff] %v98
              %v100 = vld [vmem:[%s90 + $0x40] sm:$0xff]
              %101 = vst [vmem:[%s91 + $0x20] sm:$0xff] %v100
              %v102 = vld [vmem:[%s90 + $0x50] sm:$0xff]
              %103 = vst [vmem:[%s91 + $0x28] sm:$0xff] %v102
              %v104 = vld [vmem:[%s90 + $0x60] sm:$0xff]
              %105 = vst [vmem:[%s91 + $0x30] sm:$0xff] %v104
              %v106 = vld [vmem:[%s90 + $0x70] sm:$0xff]
              %107 = vst [vmem:[%s91 + $0x38] sm:$0xff] %v106
              %v108 = vld [vmem:[%s90 + $0x80] sm:$0xff]
              %109 = vst [vmem:[%s91 + $0x40] sm:$0xff] %v108
              %v110 = vld [vmem:[%s90 + $0x90] sm:$0xff]
              %111 = vst [vmem:[%s91 + $0x48] sm:$0xff] %v110
              %v112 = vld [vmem:[%s90 + $0xa0] sm:$0xff]
              %113 = vst [vmem:[%s91 + $0x50] sm:$0xff] %v112
              %v114 = vld [vmem:[%s90 + $0xb0] sm:$0xff]
              %115 = vst [vmem:[%s91 + $0x58] sm:$0xff] %v114
              %v116 = vld [vmem:[%s90 + $0xc0] sm:$0xff]
              %117 = vst [vmem:[%s91 + $0x60] sm:$0xff] %v116
              %v118 = vld [vmem:[%s90 + $0xd0] sm:$0xff]
              %119 = vst [vmem:[%s91 + $0x68] sm:$0xff] %v118
              %v120 = vld [vmem:[%s90 + $0xe0] sm:$0xff]
              %121 = vst [vmem:[%s91 + $0x70] sm:$0xff] %v120
              %v122 = vld [vmem:[%s90 + $0xf0] sm:$0xff]
              %123 = vst [vmem:[%s91 + $0x78] sm:$0xff] %v122
              %v124 = vld [vmem:[%s90 + $0x100] sm:$0xff]
              %125 = vst [vmem:[%s91 + $0x80] sm:$0xff] %v124
              %v126 = vld [vmem:[%s90 + $0x110] sm:$0xff]
              %127 = vst [vmem:[%s91 + $0x88] sm:$0xff] %v126
              %v128 = vld [vmem:[%s90 + $0x120] sm:$0xff]
              %129 = vst [vmem:[%s91 + $0x90] sm:$0xff] %v128
              %v130 = vld [vmem:[%s90 + $0x130] sm:$0xff]
              %131 = vst [vmem:[%s91 + $0x98] sm:$0xff] %v130
              %v132 = vld [vmem:[%s90 + $0x140] sm:$0xff]
              %133 = vst [vmem:[%s91 + $0xa0] sm:$0xff] %v132
              %v134 = vld [vmem:[%s90 + $0x150] sm:$0xff]
              %135 = vst [vmem:[%s91 + $0xa8] sm:$0xff] %v134
              %v136 = vld [vmem:[%s90 + $0x160] sm:$0xff]
              %137 = vst [vmem:[%s91 + $0xb0] sm:$0xff] %v136
              %v138 = vld [vmem:[%s90 + $0x170] sm:$0xff]
              %139 = vst [vmem:[%s91 + $0xb8] sm:$0xff] %v138
              %v140 = vld [vmem:[%s90 + $0x180] sm:$0xff]
              %141 = vst [vmem:[%s91 + $0xc0] sm:$0xff] %v140
              %v142 = vld [vmem:[%s90 + $0x190] sm:$0xff]
              %143 = vst [vmem:[%s91 + $0xc8] sm:$0xff] %v142
              %v144 = vld [vmem:[%s90 + $0x1a0] sm:$0xff]
              %145 = vst [vmem:[%s91 + $0xd0] sm:$0xff] %v144
              %v146 = vld [vmem:[%s90 + $0x1b0] sm:$0xff]
              %147 = vst [vmem:[%s91 + $0xd8] sm:$0xff] %v146
              %v148 = vld [vmem:[%s90 + $0x1c0] sm:$0xff]
              %149 = vst [vmem:[%s91 + $0xe0] sm:$0xff] %v148
              %v150 = vld [vmem:[%s90 + $0x1d0] sm:$0xff]
              %151 = vst [vmem:[%s91 + $0xe8] sm:$0xff] %v150
              %v152 = vld [vmem:[%s90 + $0x1e0] sm:$0xff]
              %153 = vst [vmem:[%s91 + $0xf0] sm:$0xff] %v152
              %v154 = vld [vmem:[%s90 + $0x1f0] sm:$0xff]
              %155 = vst [vmem:[%s91 + $0xf8] sm:$0xff] %v154
            $region33: #{reverse.17} parent=27 // loop_footer
              %s89 = sadd.s32 1, %s85
            $region34: #{reverse.17} parent=27 // loop_footer_branch
              %84 = sbr.rel target = $region30
            $region35: #{reverse.17} parent=27 // loop_exit
              _
          $region28: #{reverse.17} parent=19 // pred_fallthru
            _
        $region20: #{reverse.17} parent=15 // pred_fallthru
          _
        %232 = vnop
      $region16: #{reverse.17} parent=5 // pred_fallthru
        _
      %p233 = scmp.le.s32.totalorder 1, %s6
      %p234 = scmp.lt.s32.totalorder %s6, 3
      %p235 = pnand %p233, %p234
      %p236 = pneg %p235
      // Predicated region
      $region51: #{reverse.17} parent=5 // pred_check
        _
      $region52: #{reverse.17} parent=5 // pred_check_branch
        %238 = sbr.rel (%p235) target = $region54
      $region53: #{reverse.17} parent=5 // pred_region
        %s239 = ssub.s32 %s6, 1
        %s240 = sand.u32 %s11, 1
        %s241 = sand.u32 %s11, 1
        %s242 = smul.addr %s241, 256
        %s243 = scalar_lea.vmem [#allocation0], %s242
        %s244 = sand.u32 %s11, 1
        %s245 = sand.u32 %s11, 1
        %s246 = smul.addr %s245, 256
        %s247 = scalar_lea.vmem [#allocation0], %s246
        %s248 = sand.u32 %s11, 1
        %s249 = sand.u32 %s11, 1
        %s250 = smul.addr %s249, 256
        %s251 = scalar_lea.vmem [#allocation1], %s250
        %s252 = ssub.s32 1, %s22
        %s253 = smul.u32 2, %s18
        %s254 = smul.u32 2, %s19
        %s255 = smul.u32 4, %s20
        %s256 = smul.u32 2, %s21
        %s257 = smul.u32 2, %s18
        %s258 = smul.u32 2, %s19
        %s259 = smul.u32 4, %s20
        %s260 = smul.u32 2, %s21
        %v261 = vld [vmem:[%s243] sm:$0xff]
        %262 = vperm.xlu0 %4, %v261
        %v263 = vpop.permute.xlu0 %262
        %264 = vst [vmem:[%s251] sm:$0xff] %v263
        %s265 = scalar_lea.vmem %s251, 8 [#allocation1]
        %s266 = scalar_lea.vmem %s243, 8 [#allocation0]
        %v267 = vld [vmem:[%s266] sm:$0xff]
        %268 = vperm.xlu0 %4, %v267
        %v269 = vpop.permute.xlu0 %268
        %270 = vst [vmem:[%s265] sm:$0xff] %v269
        %s271 = scalar_lea.vmem %s251, 16 [#allocation1]
        %s272 = scalar_lea.vmem %s243, 16 [#allocation0]
        %v273 = vld [vmem:[%s272] sm:$0xff]
        %274 = vperm.xlu0 %4, %v273
        %v275 = vpop.permute.xlu0 %274
        %276 = vst [vmem:[%s271] sm:$0xff] %v275
        %s277 = scalar_lea.vmem %s271, 8 [#allocation1]
        %s278 = scalar_lea.vmem %s272, 8 [#allocation0]
        %v279 = vld [vmem:[%s278] sm:$0xff]
        %280 = vperm.xlu0 %4, %v279
        %v281 = vpop.permute.xlu0 %280
        %282 = vst [vmem:[%s277] sm:$0xff] %v281
        %s283 = scalar_lea.vmem %s251, 32 [#allocation1]
        %s284 = scalar_lea.vmem %s243, 32 [#allocation0]
        %v285 = vld [vmem:[%s284] sm:$0xff]
        %286 = vperm.xlu0 %4, %v285
        %v287 = vpop.permute.xlu0 %286
        %288 = vst [vmem:[%s283] sm:$0xff] %v287
        %s289 = scalar_lea.vmem %s283, 8 [#allocation1]
        %s290 = scalar_lea.vmem %s284, 8 [#allocation0]
        %v291 = vld [vmem:[%s290] sm:$0xff]
        %292 = vperm.xlu0 %4, %v291
        %v293 = vpop.permute.xlu0 %292
        %294 = vst [vmem:[%s289] sm:$0xff] %v293
        %s295 = scalar_lea.vmem %s251, 48 [#allocation1]
        %s296 = scalar_lea.vmem %s243, 48 [#allocation0]
        %v297 = vld [vmem:[%s296] sm:$0xff]
        %298 = vperm.xlu0 %4, %v297
        %v299 = vpop.permute.xlu0 %298
        %300 = vst [vmem:[%s295] sm:$0xff] %v299
        %s301 = scalar_lea.vmem %s295, 8 [#allocation1]
        %s302 = scalar_lea.vmem %s296, 8 [#allocation0]
        %v303 = vld [vmem:[%s302] sm:$0xff]
        %304 = vperm.xlu0 %4, %v303
        %v305 = vpop.permute.xlu0 %304
        %306 = vst [vmem:[%s301] sm:$0xff] %v305
        %s307 = scalar_lea.vmem %s251, 64 [#allocation1]
        %s308 = scalar_lea.vmem %s243, 64 [#allocation0]
        %v309 = vld [vmem:[%s308] sm:$0xff]
        %310 = vperm.xlu0 %4, %v309
        %v311 = vpop.permute.xlu0 %310
        %312 = vst [vmem:[%s307] sm:$0xff] %v311
        %s313 = scalar_lea.vmem %s307, 8 [#allocation1]
        %s314 = scalar_lea.vmem %s308, 8 [#allocation0]
        %v315 = vld [vmem:[%s314] sm:$0xff]
        %316 = vperm.xlu0 %4, %v315
        %v317 = vpop.permute.xlu0 %316
        %318 = vst [vmem:[%s313] sm:$0xff] %v317
        %s319 = scalar_lea.vmem %s251, 80 [#allocation1]
        %s320 = scalar_lea.vmem %s243, 80 [#allocation0]
        %v321 = vld [vmem:[%s320] sm:$0xff]
        %322 = vperm.xlu0 %4, %v321
        %v323 = vpop.permute.xlu0 %322
        %324 = vst [vmem:[%s319] sm:$0xff] %v323
        %s325 = scalar_lea.vmem %s319, 8 [#allocation1]
        %s326 = scalar_lea.vmem %s320, 8 [#allocation0]
        %v327 = vld [vmem:[%s326] sm:$0xff]
        %328 = vperm.xlu0 %4, %v327
        %v329 = vpop.permute.xlu0 %328
        %330 = vst [vmem:[%s325] sm:$0xff] %v329
        %s331 = scalar_lea.vmem %s251, 96 [#allocation1]
        %s332 = scalar_lea.vmem %s243, 96 [#allocation0]
        %v333 = vld [vmem:[%s332] sm:$0xff]
        %334 = vperm.xlu0 %4, %v333
        %v335 = vpop.permute.xlu0 %334
        %336 = vst [vmem:[%s331] sm:$0xff] %v335
        %s337 = scalar_lea.vmem %s331, 8 [#allocation1]
        %s338 = scalar_lea.vmem %s332, 8 [#allocation0]
        %v339 = vld [vmem:[%s338] sm:$0xff]
        %340 = vperm.xlu0 %4, %v339
        %v341 = vpop.permute.xlu0 %340
        %342 = vst [vmem:[%s337] sm:$0xff] %v341
        %s343 = scalar_lea.vmem %s251, 112 [#allocation1]
        %s344 = scalar_lea.vmem %s243, 112 [#allocation0]
        %v345 = vld [vmem:[%s344] sm:$0xff]
        %346 = vperm.xlu0 %4, %v345
        %v347 = vpop.permute.xlu0 %346
        %348 = vst [vmem:[%s343] sm:$0xff] %v347
        %s349 = scalar_lea.vmem %s343, 8 [#allocation1]
        %s350 = scalar_lea.vmem %s344, 8 [#allocation0]
        %v351 = vld [vmem:[%s350] sm:$0xff]
        %352 = vperm.xlu0 %4, %v351
        %v353 = vpop.permute.xlu0 %352
        %354 = vst [vmem:[%s349] sm:$0xff] %v353
        %s355 = scalar_lea.vmem %s251, 128 [#allocation1]
        %s356 = scalar_lea.vmem %s243, 128 [#allocation0]
        %v357 = vld [vmem:[%s356] sm:$0xff]
        %358 = vperm.xlu0 %4, %v357
        %v359 = vpop.permute.xlu0 %358
        %360 = vst [vmem:[%s355] sm:$0xff] %v359
        %s361 = scalar_lea.vmem %s355, 8 [#allocation1]
        %s362 = scalar_lea.vmem %s356, 8 [#allocation0]
        %v363 = vld [vmem:[%s362] sm:$0xff]
        %364 = vperm.xlu0 %4, %v363
        %v365 = vpop.permute.xlu0 %364
        %366 = vst [vmem:[%s361] sm:$0xff] %v365
        %s367 = scalar_lea.vmem %s251, 144 [#allocation1]
        %s368 = scalar_lea.vmem %s243, 144 [#allocation0]
        %v369 = vld [vmem:[%s368] sm:$0xff]
        %370 = vperm.xlu0 %4, %v369
        %v371 = vpop.permute.xlu0 %370
        %372 = vst [vmem:[%s367] sm:$0xff] %v371
        %s373 = scalar_lea.vmem %s367, 8 [#allocation1]
        %s374 = scalar_lea.vmem %s368, 8 [#allocation0]
        %v375 = vld [vmem:[%s374] sm:$0xff]
        %376 = vperm.xlu0 %4, %v375
        %v377 = vpop.permute.xlu0 %376
        %378 = vst [vmem:[%s373] sm:$0xff] %v377
        %s379 = scalar_lea.vmem %s251, 160 [#allocation1]
        %s380 = scalar_lea.vmem %s243, 160 [#allocation0]
        %v381 = vld [vmem:[%s380] sm:$0xff]
        %382 = vperm.xlu0 %4, %v381
        %v383 = vpop.permute.xlu0 %382
        %384 = vst [vmem:[%s379] sm:$0xff] %v383
        %s385 = scalar_lea.vmem %s379, 8 [#allocation1]
        %s386 = scalar_lea.vmem %s380, 8 [#allocation0]
        %v387 = vld [vmem:[%s386] sm:$0xff]
        %388 = vperm.xlu0 %4, %v387
        %v389 = vpop.permute.xlu0 %388
        %390 = vst [vmem:[%s385] sm:$0xff] %v389
        %s391 = scalar_lea.vmem %s251, 176 [#allocation1]
        %s392 = scalar_lea.vmem %s243, 176 [#allocation0]
        %v393 = vld [vmem:[%s392] sm:$0xff]
        %394 = vperm.xlu0 %4, %v393
        %v395 = vpop.permute.xlu0 %394
        %396 = vst [vmem:[%s391] sm:$0xff] %v395
        %s397 = scalar_lea.vmem %s391, 8 [#allocation1]
        %s398 = scalar_lea.vmem %s392, 8 [#allocation0]
        %v399 = vld [vmem:[%s398] sm:$0xff]
        %400 = vperm.xlu0 %4, %v399
        %v401 = vpop.permute.xlu0 %400
        %402 = vst [vmem:[%s397] sm:$0xff] %v401
        %s403 = scalar_lea.vmem %s251, 192 [#allocation1]
        %s404 = scalar_lea.vmem %s243, 192 [#allocation0]
        %v405 = vld [vmem:[%s404] sm:$0xff]
        %406 = vperm.xlu0 %4, %v405
        %v407 = vpop.permute.xlu0 %406
        %408 = vst [vmem:[%s403] sm:$0xff] %v407
        %s409 = scalar_lea.vmem %s403, 8 [#allocation1]
        %s410 = scalar_lea.vmem %s404, 8 [#allocation0]
        %v411 = vld [vmem:[%s410] sm:$0xff]
        %412 = vperm.xlu0 %4, %v411
        %v413 = vpop.permute.xlu0 %412
        %414 = vst [vmem:[%s409] sm:$0xff] %v413
        %s415 = scalar_lea.vmem %s251, 208 [#allocation1]
        %s416 = scalar_lea.vmem %s243, 208 [#allocation0]
        %v417 = vld [vmem:[%s416] sm:$0xff]
        %418 = vperm.xlu0 %4, %v417
        %v419 = vpop.permute.xlu0 %418
        %420 = vst [vmem:[%s415] sm:$0xff] %v419
        %s421 = scalar_lea.vmem %s415, 8 [#allocation1]
        %s422 = scalar_lea.vmem %s416, 8 [#allocation0]
        %v423 = vld [vmem:[%s422] sm:$0xff]
        %424 = vperm.xlu0 %4, %v423
        %v425 = vpop.permute.xlu0 %424
        %426 = vst [vmem:[%s421] sm:$0xff] %v425
        %s427 = scalar_lea.vmem %s251, 224 [#allocation1]
        %s428 = scalar_lea.vmem %s243, 224 [#allocation0]
        %v429 = vld [vmem:[%s428] sm:$0xff]
        %430 = vperm.xlu0 %4, %v429
        %v431 = vpop.permute.xlu0 %430
        %432 = vst [vmem:[%s427] sm:$0xff] %v431
        %s433 = scalar_lea.vmem %s427, 8 [#allocation1]
        %s434 = scalar_lea.vmem %s428, 8 [#allocation0]
        %v435 = vld [vmem:[%s434] sm:$0xff]
        %436 = vperm.xlu0 %4, %v435
        %v437 = vpop.permute.xlu0 %436
        %438 = vst [vmem:[%s433] sm:$0xff] %v437
        %s439 = scalar_lea.vmem %s251, 240 [#allocation1]
        %s440 = scalar_lea.vmem %s243, 240 [#allocation0]
        %v441 = vld [vmem:[%s440] sm:$0xff]
        %442 = vperm.xlu0 %4, %v441
        %v443 = vpop.permute.xlu0 %442
        %444 = vst [vmem:[%s439] sm:$0xff] %v443
        %s445 = scalar_lea.vmem %s439, 8 [#allocation1]
        %s446 = scalar_lea.vmem %s440, 8 [#allocation0]
        %v447 = vld [vmem:[%s446] sm:$0xff]
        %448 = vperm.xlu0 %4, %v447
        %v449 = vpop.permute.xlu0 %448
        %450 = vst [vmem:[%s445] sm:$0xff] %v449
        %s451 = sand.u32 %s11, 1
        %s452 = sand.u32 %s11, 1
        %s453 = smul.addr %s452, 256
        %s454 = scalar_lea.vmem [#allocation1], %s453
        %s455 = smul.u32 2, %s18
        %s456 = smul.u32 2, %s19
        %s457 = smul.u32 4, %s20
        %s458 = smul.u32 2, %s21
        %s459 = smul.addr %s458, 2
        %s460 = sadd.s32 %s22, %s459
        %s461 = smul.addr %s457, 4
        %s462 = sadd.s32 %s460, %s461
        %s463 = smul.addr %s456, 16
        %s464 = sadd.s32 %s462, %s463
        %s465 = smul.addr %s455, 32
        %s466 = sadd.s32 %s464, %s465
        %s467 = smul.addr %s466, 8
        %s468 = scalar_lea.vmem %s1, %s467
        // Predicated region
        $region55: #{reverse.17} parent=53 // pred_check
          _
        $region56: #{reverse.17} parent=53 // pred_check_branch
          %470 = sbr.rel (0) target = $region58
        $region57: #{reverse.17} parent=53 // pred_region
          // Predicated region
          $region59: #{reverse.17} parent=57 // pred_check
            _
          $region60: #{reverse.17} parent=57 // pred_check_branch
            %472 = sbr.rel (0) target = $region62
          $region61: #{reverse.17} parent=57 // pred_region
            // Predicated region
            $region74: #{reverse.17} parent=61 // pred_check
              _
            $region75: #{reverse.17} parent=61 // pred_check_branch
              %549 = sbr.rel (0) target = $region77
            $region76: #{reverse.17} parent=61 // pred_region
              loop: start=0, step=1, limit=1
              $region78: #{reverse.17} parent=76 // loop_pre_header
                _
              $region79: #{reverse.17} parent=76 // loop_header
                %s551 = sphi 0, %s555
                %p552 = scmp.ge.s32.totalorder %s551, 1
                %s556 = sphi %s454, %s454
                %s557 = sphi %s468, %s468
              $region80: #{reverse.17} parent=76 // loop_header_branch
                %554 = sbr.rel (%p552) target = $region84
              $region81: #{reverse.17} parent=76 // loop_body
                %v558 = vld [vmem:[%s556] sm:$0xff]
                %559 = vst [vmem:[%s557] sm:$0xff] %v558
                %v560 = vld [vmem:[%s556 + $0x8] sm:$0xff]
                %561 = vst [vmem:[%s557 + $0x10] sm:$0xff] %v560
                %v562 = vld [vmem:[%s556 + $0x10] sm:$0xff]
                %563 = vst [vmem:[%s557 + $0x20] sm:$0xff] %v562
                %v564 = vld [vmem:[%s556 + $0x18] sm:$0xff]
                %565 = vst [vmem:[%s557 + $0x30] sm:$0xff] %v564
                %v566 = vld [vmem:[%s556 + $0x20] sm:$0xff]
                %567 = vst [vmem:[%s557 + $0x40] sm:$0xff] %v566
                %v568 = vld [vmem:[%s556 + $0x28] sm:$0xff]
                %569 = vst [vmem:[%s557 + $0x50] sm:$0xff] %v568
                %v570 = vld [vmem:[%s556 + $0x30] sm:$0xff]
                %571 = vst [vmem:[%s557 + $0x60] sm:$0xff] %v570
                %v572 = vld [vmem:[%s556 + $0x38] sm:$0xff]
                %573 = vst [vmem:[%s557 + $0x70] sm:$0xff] %v572
                %v574 = vld [vmem:[%s556 + $0x40] sm:$0xff]
                %575 = vst [vmem:[%s557 + $0x80] sm:$0xff] %v574
                %v576 = vld [vmem:[%s556 + $0x48] sm:$0xff]
                %577 = vst [vmem:[%s557 + $0x90] sm:$0xff] %v576
                %v578 = vld [vmem:[%s556 + $0x50] sm:$0xff]
                %579 = vst [vmem:[%s557 + $0xa0] sm:$0xff] %v578
                %v580 = vld [vmem:[%s556 + $0x58] sm:$0xff]
                %581 = vst [vmem:[%s557 + $0xb0] sm:$0xff] %v580
                %v582 = vld [vmem:[%s556 + $0x60] sm:$0xff]
                %583 = vst [vmem:[%s557 + $0xc0] sm:$0xff] %v582
                %v584 = vld [vmem:[%s556 + $0x68] sm:$0xff]
                %585 = vst [vmem:[%s557 + $0xd0] sm:$0xff] %v584
                %v586 = vld [vmem:[%s556 + $0x70] sm:$0xff]
                %587 = vst [vmem:[%s557 + $0xe0] sm:$0xff] %v586
                %v588 = vld [vmem:[%s556 + $0x78] sm:$0xff]
                %589 = vst [vmem:[%s557 + $0xf0] sm:$0xff] %v588
                %v590 = vld [vmem:[%s556 + $0x80] sm:$0xff]
                %591 = vst [vmem:[%s557 + $0x100] sm:$0xff] %v590
                %v592 = vld [vmem:[%s556 + $0x88] sm:$0xff]
                %593 = vst [vmem:[%s557 + $0x110] sm:$0xff] %v592
                %v594 = vld [vmem:[%s556 + $0x90] sm:$0xff]
                %595 = vst [vmem:[%s557 + $0x120] sm:$0xff] %v594
                %v596 = vld [vmem:[%s556 + $0x98] sm:$0xff]
                %597 = vst [vmem:[%s557 + $0x130] sm:$0xff] %v596
                %v598 = vld [vmem:[%s556 + $0xa0] sm:$0xff]
                %599 = vst [vmem:[%s557 + $0x140] sm:$0xff] %v598
                %v600 = vld [vmem:[%s556 + $0xa8] sm:$0xff]
                %601 = vst [vmem:[%s557 + $0x150] sm:$0xff] %v600
                %v602 = vld [vmem:[%s556 + $0xb0] sm:$0xff]
                %603 = vst [vmem:[%s557 + $0x160] sm:$0xff] %v602
                %v604 = vld [vmem:[%s556 + $0xb8] sm:$0xff]
                %605 = vst [vmem:[%s557 + $0x170] sm:$0xff] %v604
                %v606 = vld [vmem:[%s556 + $0xc0] sm:$0xff]
                %607 = vst [vmem:[%s557 + $0x180] sm:$0xff] %v606
                %v608 = vld [vmem:[%s556 + $0xc8] sm:$0xff]
                %609 = vst [vmem:[%s557 + $0x190] sm:$0xff] %v608
                %v610 = vld [vmem:[%s556 + $0xd0] sm:$0xff]
                %611 = vst [vmem:[%s557 + $0x1a0] sm:$0xff] %v610
                %v612 = vld [vmem:[%s556 + $0xd8] sm:$0xff]
                %613 = vst [vmem:[%s557 + $0x1b0] sm:$0xff] %v612
                %v614 = vld [vmem:[%s556 + $0xe0] sm:$0xff]
                %615 = vst [vmem:[%s557 + $0x1c0] sm:$0xff] %v614
                %v616 = vld [vmem:[%s556 + $0xe8] sm:$0xff]
                %617 = vst [vmem:[%s557 + $0x1d0] sm:$0xff] %v616
                %v618 = vld [vmem:[%s556 + $0xf0] sm:$0xff]
                %619 = vst [vmem:[%s557 + $0x1e0] sm:$0xff] %v618
                %v620 = vld [vmem:[%s556 + $0xf8] sm:$0xff]
                %621 = vst [vmem:[%s557 + $0x1f0] sm:$0xff] %v620
              $region82: #{reverse.17} parent=76 // loop_footer
                %s555 = sadd.s32 1, %s551
              $region83: #{reverse.17} parent=76 // loop_footer_branch
                %550 = sbr.rel target = $region79
              $region84: #{reverse.17} parent=76 // loop_exit
                _
            $region77: #{reverse.17} parent=61 // pred_fallthru
              _
            // Predicated region
            $region85: #{reverse.17} parent=61 // pred_check
              _
            $region86: #{reverse.17} parent=61 // pred_check_branch
              %623 = sbr.rel target = $region88
            $region87: #{reverse.17} parent=61 // pred_region
              _
            $region88: #{reverse.17} parent=61 // pred_fallthru
              _
          $region62: #{reverse.17} parent=57 // pred_fallthru
            _
          // Predicated region
          $region63: #{reverse.17} parent=57 // pred_check
            _
          $region64: #{reverse.17} parent=57 // pred_check_branch
            %474 = sbr.rel target = $region66
          $region65: #{reverse.17} parent=57 // pred_region
            loop: start=0, step=1, limit=1
            $region67: #{reverse.17} parent=65 // loop_pre_header
              _
            $region68: #{reverse.17} parent=65 // loop_header
              %s477 = sphi 0, %s481
              %p478 = scmp.ge.s32.totalorder %s477, 1
              %s482 = sphi %s454, %s454
              %s483 = sphi %s468, %s468
            $region69: #{reverse.17} parent=65 // loop_header_branch
              %480 = sbr.rel (%p478) target = $region73
            $region70: #{reverse.17} parent=65 // loop_body
              %v484 = vld [vmem:[%s482] sm:$0xff]
              %485 = vst [vmem:[%s483] sm:$0xff] %v484
              %v486 = vld [vmem:[%s482 + $0x8] sm:$0xff]
              %487 = vst [vmem:[%s483 + $0x10] sm:$0xff] %v486
              %v488 = vld [vmem:[%s482 + $0x10] sm:$0xff]
              %489 = vst [vmem:[%s483 + $0x20] sm:$0xff] %v488
              %v490 = vld [vmem:[%s482 + $0x18] sm:$0xff]
              %491 = vst [vmem:[%s483 + $0x30] sm:$0xff] %v490
              %v492 = vld [vmem:[%s482 + $0x20] sm:$0xff]
              %493 = vst [vmem:[%s483 + $0x40] sm:$0xff] %v492
              %v494 = vld [vmem:[%s482 + $0x28] sm:$0xff]
              %495 = vst [vmem:[%s483 + $0x50] sm:$0xff] %v494
              %v496 = vld [vmem:[%s482 + $0x30] sm:$0xff]
              %497 = vst [vmem:[%s483 + $0x60] sm:$0xff] %v496
              %v498 = vld [vmem:[%s482 + $0x38] sm:$0xff]
              %499 = vst [vmem:[%s483 + $0x70] sm:$0xff] %v498
              %v500 = vld [vmem:[%s482 + $0x40] sm:$0xff]
              %501 = vst [vmem:[%s483 + $0x80] sm:$0xff] %v500
              %v502 = vld [vmem:[%s482 + $0x48] sm:$0xff]
              %503 = vst [vmem:[%s483 + $0x90] sm:$0xff] %v502
              %v504 = vld [vmem:[%s482 + $0x50] sm:$0xff]
              %505 = vst [vmem:[%s483 + $0xa0] sm:$0xff] %v504
              %v506 = vld [vmem:[%s482 + $0x58] sm:$0xff]
              %507 = vst [vmem:[%s483 + $0xb0] sm:$0xff] %v506
              %v508 = vld [vmem:[%s482 + $0x60] sm:$0xff]
              %509 = vst [vmem:[%s483 + $0xc0] sm:$0xff] %v508
              %v510 = vld [vmem:[%s482 + $0x68] sm:$0xff]
              %511 = vst [vmem:[%s483 + $0xd0] sm:$0xff] %v510
              %v512 = vld [vmem:[%s482 + $0x70] sm:$0xff]
              %513 = vst [vmem:[%s483 + $0xe0] sm:$0xff] %v512
              %v514 = vld [vmem:[%s482 + $0x78] sm:$0xff]
              %515 = vst [vmem:[%s483 + $0xf0] sm:$0xff] %v514
              %v516 = vld [vmem:[%s482 + $0x80] sm:$0xff]
              %517 = vst [vmem:[%s483 + $0x100] sm:$0xff] %v516
              %v518 = vld [vmem:[%s482 + $0x88] sm:$0xff]
              %519 = vst [vmem:[%s483 + $0x110] sm:$0xff] %v518
              %v520 = vld [vmem:[%s482 + $0x90] sm:$0xff]
              %521 = vst [vmem:[%s483 + $0x120] sm:$0xff] %v520
              %v522 = vld [vmem:[%s482 + $0x98] sm:$0xff]
              %523 = vst [vmem:[%s483 + $0x130] sm:$0xff] %v522
              %v524 = vld [vmem:[%s482 + $0xa0] sm:$0xff]
              %525 = vst [vmem:[%s483 + $0x140] sm:$0xff] %v524
              %v526 = vld [vmem:[%s482 + $0xa8] sm:$0xff]
              %527 = vst [vmem:[%s483 + $0x150] sm:$0xff] %v526
              %v528 = vld [vmem:[%s482 + $0xb0] sm:$0xff]
              %529 = vst [vmem:[%s483 + $0x160] sm:$0xff] %v528
              %v530 = vld [vmem:[%s482 + $0xb8] sm:$0xff]
              %531 = vst [vmem:[%s483 + $0x170] sm:$0xff] %v530
              %v532 = vld [vmem:[%s482 + $0xc0] sm:$0xff]
              %533 = vst [vmem:[%s483 + $0x180] sm:$0xff] %v532
              %v534 = vld [vmem:[%s482 + $0xc8] sm:$0xff]
              %535 = vst [vmem:[%s483 + $0x190] sm:$0xff] %v534
              %v536 = vld [vmem:[%s482 + $0xd0] sm:$0xff]
              %537 = vst [vmem:[%s483 + $0x1a0] sm:$0xff] %v536
              %v538 = vld [vmem:[%s482 + $0xd8] sm:$0xff]
              %539 = vst [vmem:[%s483 + $0x1b0] sm:$0xff] %v538
              %v540 = vld [vmem:[%s482 + $0xe0] sm:$0xff]
              %541 = vst [vmem:[%s483 + $0x1c0] sm:$0xff] %v540
              %v542 = vld [vmem:[%s482 + $0xe8] sm:$0xff]
              %543 = vst [vmem:[%s483 + $0x1d0] sm:$0xff] %v542
              %v544 = vld [vmem:[%s482 + $0xf0] sm:$0xff]
              %545 = vst [vmem:[%s483 + $0x1e0] sm:$0xff] %v544
              %v546 = vld [vmem:[%s482 + $0xf8] sm:$0xff]
              %547 = vst [vmem:[%s483 + $0x1f0] sm:$0xff] %v546
            $region71: #{reverse.17} parent=65 // loop_footer
              %s481 = sadd.s32 1, %s477
            $region72: #{reverse.17} parent=65 // loop_footer_branch
              %476 = sbr.rel target = $region68
            $region73: #{reverse.17} parent=65 // loop_exit
              _
          $region66: #{reverse.17} parent=57 // pred_fallthru
            _
        $region58: #{reverse.17} parent=53 // pred_fallthru
          _
        %624 = vnop
      $region54: #{reverse.17} parent=5 // pred_fallthru
        _
      %p625 = scmp.le.s32.totalorder 2, %s6
      // Predicated region
      $region89: #{reverse.17} parent=5 // pred_check
        %p626 = pneg %p625
      $region90: #{reverse.17} parent=5 // pred_check_branch
        %628 = sbr.rel (%p626) target = $region92
      $region91: #{reverse.17} parent=5 // pred_region
        %s629 = ssub.s32 %s6, 2
        %s630 = sand.u32 %s12, 1
        %s631 = sand.u32 %s12, 1
        %s632 = smul.addr %s631, 256
        %s633 = scalar_lea.vmem [#allocation1], %s632
      $region92: #{reverse.17} parent=5 // pred_fallthru
        _
    $region6: #{reverse.17} parent=1 // loop_footer
      %s10 = sadd.s32 1, %s6
    $region7: #{reverse.17} parent=1 // loop_footer_branch
      %5 = sbr.rel target = $region3
    $region8: #{reverse.17} parent=1 // loop_exit
      _

// kernel: resonance_stack_forward.4
$region0: #{resonance_stack_forward.4}
  #allocation0 [shape = 'u32[]', space=smem, size = 0x4, offset = 0x4, fixed_abs, tag = 'smem constant byte address 0x4 - core index']
  #allocation1 [shape = 'u32[144,128]{1,0:T(1,128)}', space=vmem, size = 0x12000, scoped, tag = 'internal scratch']
  %s0 = inlined_call_operand.vmem [shape: bf16[4,4,16,256], index: 0, kind: input, shape index: {}]
  %s1 = inlined_call_operand.vmem [shape: bf16[4,4,256], index: 1, kind: input, shape index: {}]
  %s2 = inlined_call_operand.vmem [shape: f32[16,1], index: 2, kind: input, shape index: {}]
  %s3 = inlined_call_operand.vmem [shape: f32[4,1,256], index: 3, kind: output, shape index: {}]
  %s4 = sld [smem:[#allocation0]]
  $region45: #{resonance_stack_forward.4} parent=0
    _
  %s6 = ssub.s32 1, %s4
  %s7 = scalar_select 0, %s6, %s4
  loop: start=0, step=1, limit=6
  $region2: #{resonance_stack_forward.4} parent=0 // loop_pre_header
    _
  $region3: #{resonance_stack_forward.4} parent=0 // loop_header
    %s9 = sphi 0, %s13
    %p10 = scmp.ge.s32.totalorder %s9, 6
    %s16 = sphi 0, %s28
    %s17 = sphi 0, %s24
    %s18 = sphi 0, %s16
    %s19 = sphi 0, %s17
    %s20 = sphi 0, %s18
    %s21 = sphi 0, %s19
    %s33 = sphi 0, %s35
    %s36 = sphi 0, %s33
    %s37 = sphi 0, %s36
    %s53 = sphi 0, %s37
    %s61 = sphi 0, %s63
    %s64 = sphi 0, %s61
    %s65 = sphi 0, %s64
    %s81 = sphi 0, %s65
    %s85 = sphi 0, %s85
    %s87 = sphi 0, %s85
    %s88 = sphi 0, %s87
    %s102 = sphi 0, %s88
    %s110 = sphi 0, %s112
    %s113 = sphi 0, %s110
    %s114 = sphi 0, %s113
    %s130 = sphi 0, %s114
  $region4: #{resonance_stack_forward.4} parent=0 // loop_header_branch
    %12 = sbr.rel (%p10) target = $region8
  $region5: #{resonance_stack_forward.4} parent=0 // loop_body
    %s14 = ssub.s32 %s9, 1
    %s15 = ssub.s32 %s9, 2
    %s22 = sadd.s32 1, %s17
    %p23 = scmp.ge.s32.totalorder %s22, 1
    %s24 = scalar_select %p23, 0, %s22
    %s25 = sadd.s32 1, %s16
    %s26 = scalar_select %p23, %s25, %s16
    %p27 = scmp.ge.s32.totalorder %s26, 4
    %s28 = scalar_select %p27, 0, %s26
    %s29 = ssub.s32 %s16, %s28
    %s30 = ssub.s32 %s17, %s24
    %s31 = sor.u32 %s29, %s30
    %p32 = scmp.eq.s32.totalorder %s31, 0
    %s34 = sadd.s32 %s33, 1
    %s35 = scalar_select %p32, %s33, %s34
    %p38 = pneg %p32
    %p39 = scmp.eq.s32.totalorder %s9, 3
    %p40 = por %p38, %p39
    %p41 = scmp.ne.s32.totalorder %s33, %s36
    %p42 = scmp.eq.s32.totalorder %s9, 0
    %p43 = por %p41, %p42
    %p44 = scmp.ne.s32.totalorder %s33, %s36
    %p45 = scmp.eq.s32.totalorder %s14, 3
    %p46 = por %p44, %p45
    %p47 = scmp.ne.s32.totalorder %s36, %s37
    %p48 = scmp.eq.s32.totalorder %s14, 0
    %p49 = por %p47, %p48
    %p50 = scmp.ne.s32.totalorder %s36, %s37
    %p51 = scmp.eq.s32.totalorder %s15, 3
    %p52 = por %p50, %p51
    %p54 = scmp.ne.s32.totalorder %s37, %s53
    %p55 = scmp.eq.s32.totalorder %s15, 0
    %p56 = por %p54, %p55
    %s57 = ssub.s32 %s16, %s28
    %s58 = ssub.s32 %s17, %s24
    %s59 = sor.u32 %s57, %s58
    %p60 = scmp.eq.s32.totalorder %s59, 0
    %s62 = sadd.s32 %s61, 1
    %s63 = scalar_select %p60, %s61, %s62
    %p66 = pneg %p60
    %p67 = scmp.eq.s32.totalorder %s9, 3
    %p68 = por %p66, %p67
    %p69 = scmp.ne.s32.totalorder %s61, %s64
    %p70 = scmp.eq.s32.totalorder %s9, 0
    %p71 = por %p69, %p70
    %p72 = scmp.ne.s32.totalorder %s61, %s64
    %p73 = scmp.eq.s32.totalorder %s14, 3
    %p74 = por %p72, %p73
    %p75 = scmp.ne.s32.totalorder %s64, %s65
    %p76 = scmp.eq.s32.totalorder %s14, 0
    %p77 = por %p75, %p76
    %p78 = scmp.ne.s32.totalorder %s64, %s65
    %p79 = scmp.eq.s32.totalorder %s15, 3
    %p80 = por %p78, %p79
    %p82 = scmp.ne.s32.totalorder %s65, %s81
    %p83 = scmp.eq.s32.totalorder %s15, 0
    %p84 = por %p82, %p83
    %s86 = sadd.s32 %s85, 1
    %p89 = scmp.eq.s32.totalorder %s9, 3
    %p90 = scmp.ne.s32.totalorder %s85, %s87
    %p91 = scmp.eq.s32.totalorder %s9, 0
    %p92 = por %p90, %p91
    %p93 = scmp.ne.s32.totalorder %s85, %s87
    %p94 = scmp.eq.s32.totalorder %s14, 3
    %p95 = por %p93, %p94
    %p96 = scmp.ne.s32.totalorder %s87, %s88
    %p97 = scmp.eq.s32.totalorder %s14, 0
    %p98 = por %p96, %p97
    %p99 = scmp.ne.s32.totalorder %s87, %s88
    %p100 = scmp.eq.s32.totalorder %s15, 3
    %p101 = por %p99, %p100
    %p103 = scmp.ne.s32.totalorder %s88, %s102
    %p104 = scmp.eq.s32.totalorder %s15, 0
    %p105 = por %p103, %p104
    %s106 = ssub.s32 %s16, %s28
    %s107 = ssub.s32 %s17, %s24
    %s108 = sor.u32 %s106, %s107
    %p109 = scmp.eq.s32.totalorder %s108, 0
    %s111 = sadd.s32 %s110, 1
    %s112 = scalar_select %p109, %s110, %s111
    %p115 = pneg %p109
    %p116 = scmp.eq.s32.totalorder %s9, 3
    %p117 = por %p115, %p116
    %p118 = scmp.ne.s32.totalorder %s110, %s113
    %p119 = scmp.eq.s32.totalorder %s9, 0
    %p120 = por %p118, %p119
    %p121 = scmp.ne.s32.totalorder %s110, %s113
    %p122 = scmp.eq.s32.totalorder %s14, 3
    %p123 = por %p121, %p122
    %p124 = scmp.ne.s32.totalorder %s113, %s114
    %p125 = scmp.eq.s32.totalorder %s14, 0
    %p126 = por %p124, %p125
    %p127 = scmp.ne.s32.totalorder %s113, %s114
    %p128 = scmp.eq.s32.totalorder %s15, 3
    %p129 = por %p127, %p128
    %p131 = scmp.ne.s32.totalorder %s114, %s130
    %p132 = scmp.eq.s32.totalorder %s15, 0
    %p133 = por %p131, %p132
    %p134 = scmp.le.s32.totalorder 1, %s9
    %p135 = scmp.lt.s32.totalorder %s9, 5
    %p136 = pnand %p134, %p135
    %p137 = pneg %p136
    // Predicated region
    $region9: #{resonance_stack_forward.4} parent=5 // pred_check
      _
    $region10: #{resonance_stack_forward.4} parent=5 // pred_check_branch
      %139 = sbr.rel (%p136) target = $region12
    $region11: #{resonance_stack_forward.4} parent=5 // pred_region
      %s140 = ssub.s32 %s9, 1
      // Predicated region
      $region13: #{resonance_stack_forward.4} parent=11 // pred_check
        %p141 = pneg %p98
      $region14: #{resonance_stack_forward.4} parent=11 // pred_check_branch
        %143 = sbr.rel (%p141) target = $region16
      $region15: #{resonance_stack_forward.4} parent=11 // pred_region
        _
      $region16: #{resonance_stack_forward.4} parent=11 // pred_fallthru
        _
    $region12: #{resonance_stack_forward.4} parent=5 // pred_fallthru
      _
    %p144 = scmp.lt.s32.totalorder %s9, 4
    // Predicated region
    $region17: #{resonance_stack_forward.4} parent=5 // pred_check
      %p145 = pneg %p144
    $region18: #{resonance_stack_forward.4} parent=5 // pred_check_branch
      %147 = sbr.rel (%p145) target = $region20
    $region19: #{resonance_stack_forward.4} parent=5 // pred_region
      // Predicated region
      $region21: #{resonance_stack_forward.4} parent=19 // pred_check
        %p148 = pneg %p43
      $region22: #{resonance_stack_forward.4} parent=19 // pred_check_branch
        %150 = sbr.rel (%p148) target = $region24
      $region23: #{resonance_stack_forward.4} parent=19 // pred_region
        %s151 = smul.u32 2, %s17
        %p152 = scmp.lt.s32.totalorder %s16, 3
        %s153 = scalar_select %p152, %s16, 3
        %p154 = scmp.lt.s32.totalorder %s151, 1
        %s155 = scalar_select %p154, %s151, 1
        %s156 = smul.addr %s153, 16
        %s157 = sadd.s32 %s155, %s156
        %s158 = smul.addr %s157, 4
        %s159 = scalar_lea.vmem %s0, %s158
        %s160 = smul.u32 2, %s17
      $region24: #{resonance_stack_forward.4} parent=19 // pred_fallthru
        _
      // Predicated region
      $region25: #{resonance_stack_forward.4} parent=19 // pred_check
        %p161 = pneg %p71
      $region26: #{resonance_stack_forward.4} parent=19 // pred_check_branch
        %163 = sbr.rel (%p161) target = $region28
      $region27: #{resonance_stack_forward.4} parent=19 // pred_region
        %s164 = smul.u32 2, %s17
        %p165 = scmp.lt.s32.totalorder %s16, 3
        %s166 = scalar_select %p165, %s16, 3
        %p167 = scmp.lt.s32.totalorder %s164, 1
        %s168 = scalar_select %p167, %s164, 1
        %s169 = smul.addr %s166, 2
        %s170 = sadd.s32 %s168, %s169
        %s171 = smul.addr %s170, 2
        %s172 = scalar_lea.vmem %s1, %s171
        %s173 = smul.u32 2, %s17
      $region28: #{resonance_stack_forward.4} parent=19 // pred_fallthru
        _
    $region20: #{resonance_stack_forward.4} parent=5 // pred_fallthru
      _
    %p174 = scmp.le.s32.totalorder 1, %s9
    %p175 = scmp.lt.s32.totalorder %s9, 5
    %p176 = pnand %p174, %p175
    %p177 = pneg %p176
    // Predicated region
    $region29: #{resonance_stack_forward.4} parent=5 // pred_check
      _
    $region30: #{resonance_stack_forward.4} parent=5 // pred_check_branch
      %179 = sbr.rel (%p176) target = $region32
    $region31: #{resonance_stack_forward.4} parent=5 // pred_region
      %s180 = ssub.s32 %s9, 1
      %s181 = smul.u32 2, %s19
      %p182 = scmp.lt.s32.totalorder %s18, 3
      %s183 = scalar_select %p182, %s18, 3
      %p184 = scmp.lt.s32.totalorder %s181, 1
      %s185 = scalar_select %p184, %s181, 1
      %s186 = smul.addr %s183, 16
      %s187 = sadd.s32 %s185, %s186
      %s188 = smul.addr %s187, 4
      %s189 = scalar_lea.vmem %s0, %s188
      %p190 = pneg %p49
      %p191 = pneg %p46
      %s192 = smul.u32 2, %s19
      %p193 = scmp.lt.s32.totalorder %s18, 3
      %s194 = scalar_select %p193, %s18, 3
      %p195 = scmp.lt.s32.totalorder %s192, 1
      %s196 = scalar_select %p195, %s192, 1
      %s197 = smul.addr %s194, 2
      %s198 = sadd.s32 %s196, %s197
      %s199 = smul.addr %s198, 2
      %s200 = scalar_lea.vmem %s1, %s199
      %p201 = pneg %p77
      %p202 = pneg %p74
      %p203 = pneg %p98
      %p204 = pneg %p95
      %p205 = pneg %p126
      %p206 = pneg %p123
      %s207 = smul.u32 2, %s19
      %p208 = scmp.lt.s32.totalorder %s18, 3
      %s209 = scalar_select %p208, %s18, 3
      %p210 = scmp.lt.s32.totalorder %s207, 1
      %s211 = scalar_select %p210, %s207, 1
      %s212 = smul.addr %s209, 2
      %s213 = sadd.s32 %s211, %s212
      %s214 = scalar_lea.vmem %s3, %s213
      %s215 = smul.u32 2, %s19
      %p216 = scmp.lt.s32.totalorder %s18, 3
      %s217 = scalar_select %p216, %s18, 3
      %p218 = scmp.lt.s32.totalorder %s215, 1
      %s219 = scalar_select %p218, %s215, 1
      %s220 = smul.addr %s217, 16
      %s221 = sadd.s32 %s219, %s220
      %s222 = smul.addr %s221, 4
      %s223 = scalar_lea.vmem %s0, %s222
      %s224 = smul.u32 2, %s19
      %s225 = smul.u32 2, %s19
      %p226 = scmp.lt.s32.totalorder %s18, 3
      %s227 = scalar_select %p226, %s18, 3
      %p228 = scmp.lt.s32.totalorder %s225, 1
      %s229 = scalar_select %p228, %s225, 1
      %s230 = smul.addr %s227, 2
      %s231 = sadd.s32 %s229, %s230
      %s232 = smul.addr %s231, 2
      %s233 = scalar_lea.vmem %s1, %s232
      %s234 = smul.u32 2, %s19
      %s235 = smul.u32 2, %s19
      %p236 = scmp.lt.s32.totalorder %s18, 3
      %s237 = scalar_select %p236, %s18, 3
      %p238 = scmp.lt.s32.totalorder %s235, 1
      %s239 = scalar_select %p238, %s235, 1
      %s240 = smul.addr %s237, 2
      %s241 = sadd.s32 %s239, %s240
      %s242 = scalar_lea.vmem %s3, %s241
      %s243 = smul.u32 2, %s19
      %v244 = vld [vmem:[%s223] sm:$0xff]
      %v245 = vld [vmem:[%s223 + $0x8] sm:$0xff]
      %v246 = vunpack.c.l.bf16 %v244
      %v247 = vunpack.c.h.bf16 %v244
      %v248 = vunpack.c.l.bf16 %v245
      %v249 = vunpack.c.h.bf16 %v245
      %v250 = vld [vmem:[%s233] sm:$0x5]
      %v251 = vunpack.c.l.bf16 %v250
      %v253 = vlaneseq
      %v254 = vshrl.u32 %v253, 7
      %v255 = vsub.s32 0, %v254
      %v256 = vrot.slane %v251, %v255
      %v257 = vlaneseq
      %v258 = vshrl.u32 %v257, 7
      %v259 = vsub.s32 4, %v258
      %v260 = vrot.slane %v251, %v259
      %v263 = vlaneseq
      %v264 = vshrl.u32 %v263, 7
      %v265 = vsub.s32 0, %v264
      %v266 = vrot.slane %v256, %v265
      %v267 = vlaneseq
      %v268 = vshrl.u32 %v267, 7
      %v269 = vsub.s32 0, %v268
      %v270 = vrot.slane %v260, %v269
      %v271 = vmul.f32 %v246, %v266
      %v272 = vmul.f32 %v247, %v270
      %v273 = vmul.f32 %v248, %v266
      %v274 = vmul.f32 %v249, %v270
      %s275 = scalar_lea.vmem %s223, 16
      %v276 = vld [vmem:[%s275] sm:$0xff]
      %v277 = vld [vmem:[%s275 + $0x8] sm:$0xff]
      %v278 = vunpack.c.l.bf16 %v276
      %v279 = vunpack.c.h.bf16 %v276
      %v280 = vunpack.c.l.bf16 %v277
      %v281 = vunpack.c.h.bf16 %v277
      %v282 = vlaneseq
      %v283 = vshrl.u32 %v282, 7
      %v284 = vsub.s32 1, %v283
      %v285 = vrot.slane %v251, %v284
      %v286 = vlaneseq
      %v287 = vshrl.u32 %v286, 7
      %v288 = vsub.s32 5, %v287
      %v289 = vrot.slane %v251, %v288
      %v292 = vlaneseq
      %v293 = vshrl.u32 %v292, 7
      %v294 = vsub.s32 1, %v293
      %v295 = vrot.slane %v285, %v294
      %v296 = vlaneseq
      %v297 = vshrl.u32 %v296, 7
      %v298 = vsub.s32 1, %v297
      %v299 = vrot.slane %v289, %v298
      %v300 = vmul.f32 %v278, %v295
      %v301 = vmul.f32 %v279, %v299
      %v302 = vmul.f32 %v280, %v295
      %v303 = vmul.f32 %v281, %v299
      %v304 = vadd.f32 %v271, %v300
      %v305 = vadd.f32 %v272, %v301
      %v306 = vadd.f32 %v273, %v302
      %v307 = vadd.f32 %v274, %v303
      %s308 = scalar_lea.vmem %s223, 32
      %v309 = vld [vmem:[%s308] sm:$0xff]
      %v310 = vld [vmem:[%s308 + $0x8] sm:$0xff]
      %v311 = vunpack.c.l.bf16 %v309
      %v312 = vunpack.c.h.bf16 %v309
      %v313 = vunpack.c.l.bf16 %v310
      %v314 = vunpack.c.h.bf16 %v310
      %v315 = vld [vmem:[%s233] sm:$0xa]
      %v316 = vunpack.c.l.bf16 %v315
      %v318 = vlaneseq
      %v319 = vshrl.u32 %v318, 7
      %v320 = vsub.s32 2, %v319
      %v321 = vrot.slane %v316, %v320
      %v322 = vlaneseq
      %v323 = vshrl.u32 %v322, 7
      %v324 = vsub.s32 6, %v323
      %v325 = vrot.slane %v316, %v324
      %v328 = vlaneseq
      %v329 = vshrl.u32 %v328, 7
      %v330 = vsub.s32 2, %v329
      %v331 = vrot.slane %v321, %v330
      %v332 = vlaneseq
      %v333 = vshrl.u32 %v332, 7
      %v334 = vsub.s32 2, %v333
      %v335 = vrot.slane %v325, %v334
      %v336 = vmul.f32 %v311, %v331
      %v337 = vmul.f32 %v312, %v335
      %v338 = vmul.f32 %v313, %v331
      %v339 = vmul.f32 %v314, %v335
      %v340 = vadd.f32 %v304, %v336
      %v341 = vadd.f32 %v305, %v337
      %v342 = vadd.f32 %v306, %v338
      %v343 = vadd.f32 %v307, %v339
      %s344 = scalar_lea.vmem %s223, 48
      %v345 = vld [vmem:[%s344] sm:$0xff]
      %v346 = vld [vmem:[%s344 + $0x8] sm:$0xff]
      %v347 = vunpack.c.l.bf16 %v345
      %v348 = vunpack.c.h.bf16 %v345
      %v349 = vunpack.c.l.bf16 %v346
      %v350 = vunpack.c.h.bf16 %v346
      %v351 = vlaneseq
      %v352 = vshrl.u32 %v351, 7
      %v353 = vsub.s32 3, %v352
      %v354 = vrot.slane %v316, %v353
      %v355 = vlaneseq
      %v356 = vshrl.u32 %v355, 7
      %v357 = vsub.s32 7, %v356
      %v358 = vrot.slane %v316, %v357
      %v361 = vlaneseq
      %v362 = vshrl.u32 %v361, 7
      %v363 = vsub.s32 3, %v362
      %v364 = vrot.slane %v354, %v363
      %v365 = vlaneseq
      %v366 = vshrl.u32 %v365, 7
      %v367 = vsub.s32 3, %v366
      %v368 = vrot.slane %v358, %v367
      %v369 = vmul.f32 %v347, %v364
      %v370 = vmul.f32 %v348, %v368
      %v371 = vmul.f32 %v349, %v364
      %v372 = vmul.f32 %v350, %v368
      %v373 = vadd.f32 %v340, %v369
      %v374 = vadd.f32 %v341, %v370
      %v375 = vadd.f32 %v342, %v371
      %v376 = vadd.f32 %v343, %v372
      %v377 = vld [vmem:[%s2] sm:$0xff]
      %v378 = vld [vmem:[%s2 + $0x8] sm:$0xff]
      %380 = vset.pattern.permute.xlu0 0
      %381 = vperm.xlu0 %380, %v377
      %v382 = vpop.permute.xlu0 %381
      %385 = vset.pattern.permute.xlu0 0
      %386 = vperm.xlu0 %385, %v378
      %v387 = vpop.permute.xlu0 %386
      %v389 = vmul.f32 %v373, %v382
      %v390 = vmul.f32 %v374, %v382
      %v391 = vmul.f32 %v375, %v387
      %v392 = vmul.f32 %v376, %v387
      %v393 = vtanh.pop %v389
      %v394 = vtanh.pop %v390
      %v395 = vtanh.pop %v391
      %v396 = vtanh.pop %v392
      %v397 = vadd.f32 %v393, %v395
      %v398 = vrot.slane %v397, 4
      %v399 = vadd.f32 %v397, %v398
      %v400 = vrot.slane %v399, 2
      %v401 = vadd.f32 %v399, %v400
      %v402 = vrot.slane %v401, 1
      %v403 = vadd.f32 %v401, %v402
      %v404 = vadd.f32 %v394, %v396
      %v405 = vrot.slane %v404, 4
      %v406 = vadd.f32 %v404, %v405
      %v407 = vrot.slane %v406, 2
      %v408 = vadd.f32 %v406, %v407
      %v409 = vrot.slane %v408, 1
      %v410 = vadd.f32 %v408, %v409
      %v413 = vcombine.low %v403, %v410
      %v415 = vunpack.c.l.s4 1966171168
      %v416 = vunpack.c.0.s8 %v415
      %v417 = vlaneseq
      %v418 = vshrl.u32 %v417, 7
      %v419 = vsub.s32 %v416, %v418
      %v420 = vrot.slane %v413, %v419
      %v422 = vunpack.c.l.s4 1966171168
      %v423 = vunpack.c.0.s8 %v422
      %v424 = vlaneseq
      %v425 = vshrl.u32 %v424, 7
      %v426 = vsub.s32 %v423, %v425
      %v427 = vrot.slane %v420, %v426
      %v429 = vlaneseq
      %vm430 = vcmp.ge.s32.totalorder %v429, 0
      %vm431 = vcmp.lt.s32.totalorder %v429, 256
      %vm432 = vmand %vm430, %vm431
      %433 = vst.msk [vmem:[%s242] sm:$0x3] %vm432, %v427
      %s434 = smul.u32 2, %s19
      %p435 = scmp.lt.s32.totalorder %s18, 3
      %s436 = scalar_select %p435, %s18, 3
      %p437 = scmp.lt.s32.totalorder %s434, 1
      %s438 = scalar_select %p437, %s434, 1
      %s439 = smul.addr %s436, 2
      %s440 = sadd.s32 %s438, %s439
      %s441 = scalar_lea.vmem %s3, %s440
      // Predicated region
      $region33: #{resonance_stack_forward.4} parent=31 // pred_check
        %p442 = pneg %p123
      $region34: #{resonance_stack_forward.4} parent=31 // pred_check_branch
        %444 = sbr.rel (%p442) target = $region36
      $region35: #{resonance_stack_forward.4} parent=31 // pred_region
        %s445 = smul.u32 2, %s19
      $region36: #{resonance_stack_forward.4} parent=31 // pred_fallthru
        _
    $region32: #{resonance_stack_forward.4} parent=5 // pred_fallthru
      _
    %p446 = scmp.le.s32.totalorder 2, %s9
    // Predicated region
    $region37: #{resonance_stack_forward.4} parent=5 // pred_check
      %p447 = pneg %p446
    $region38: #{resonance_stack_forward.4} parent=5 // pred_check_branch
      %449 = sbr.rel (%p447) target = $region40
    $region39: #{resonance_stack_forward.4} parent=5 // pred_region
      %s450 = ssub.s32 %s9, 2
      // Predicated region
      $region41: #{resonance_stack_forward.4} parent=39 // pred_check
        %p451 = pneg %p129
      $region42: #{resonance_stack_forward.4} parent=39 // pred_check_branch
        %453 = sbr.rel (%p451) target = $region44
      $region43: #{resonance_stack_forward.4} parent=39 // pred_region
        %s454 = smul.u32 2, %s21
        %p455 = scmp.lt.s32.totalorder %s20, 3
        %s456 = scalar_select %p455, %s20, 3
        %p457 = scmp.lt.s32.totalorder %s454, 1
        %s458 = scalar_select %p457, %s454, 1
        %s459 = smul.addr %s456, 2
        %s460 = sadd.s32 %s458, %s459
        %s461 = scalar_lea.vmem %s3, %s460
      $region44: #{resonance_stack_forward.4} parent=39 // pred_fallthru
        _
    $region40: #{resonance_stack_forward.4} parent=5 // pred_fallthru
      _
  $region6: #{resonance_stack_forward.4} parent=0 // loop_footer
    %s13 = sadd.s32 1, %s9
  $region7: #{resonance_stack_forward.4} parent=0 // loop_footer_branch
    %8 = sbr.rel target = $region3
  $region8: #{resonance_stack_forward.4} parent=0 // loop_exit
    _

</llo_original>
